<compile_context>
chip_gen: v5e
topology: v5e:2x2
jax: 0.10.0
libtpu: 0.0.40
codegen_flags: <defaults>
</compile_context>

<pallas_src>
import jax
import jax.numpy as jnp
import numpy as np
from jax.experimental import pallas as pl
from jax.experimental.pallas import tpu as pltpu

N_SYMBOLS = 4 + 4  # arch_params.n_symbols (by.shape[-1] undefined upstream) -> 8


# ---------------------------------------------------------------------------
# Fused kernel: conv1+ReLU+pool -> conv2+ReLU+pool -> Flatten -> NAC -> PReLU -> NAC
# ---------------------------------------------------------------------------
def _fused_forward_kernel(alpha_ref,    # SMEM (1,)            PReLU alpha
                          patches_ref,  # (4*B*P1, 64)         conv1 im2col patches
                          w1_ref,       # (64, 4)              conv1 weight (K, Cout)
                          b1_ref,       # (1, 4)
                          gsel_ref,     # (4*4*B*P2, B*P1)     one-hot conv2 im2col gather
                          w2t_ref,      # (4, 4, 4)            conv2 weight per tap (t, cin, cout)
                          b2_ref,       # (1, 4)
                          sel_ref,      # (P2, B, B*P2)        one-hot pooled-position selectors
                          w1sub_ref,    # (P2, 4, S*100)       fused NAC-1 weight, regrouped by q
                          w2f_ref,      # (S*100, S*4)         fused NAC-2 weight
                          y_ref):       # (B, S*4)             output
    # ---- conv1 + bias: all 2x2 pool-window members and batches in ONE MXU push
    blk = patches_ref.shape[0] // 4                       # B*P1 rows per pool member
    pre1 = jnp.dot(patches_ref[...], w1_ref[...],
                   preferred_element_type=jnp.float32) + b1_ref[...]
    # ReLU then MaxPool2d((2,2))  (relu is monotone -> relu(max) == max(relu))
    h1 = jnp.maximum(jnp.maximum(pre1[:blk], pre1[blk:2 * blk]),
                     jnp.maximum(pre1[2 * blk:3 * blk], pre1[3 * blk:]))
    h1 = jnp.maximum(h1, 0.0)                             # (B*P1, 4)

    # ---- conv2: one-hot gather (= im2col) + per-tap weight matmuls ----------
    gathered = jnp.dot(gsel_ref[...], h1, preferred_element_type=jnp.float32)
    n_eval = gathered.shape[0] // 4                       # 4*B*P2 rows per tap block
    pre2 = b2_ref[...]
    for t in range(w2t_ref.shape[0]):                     # static unroll, 2x2 taps
        pre2 = pre2 + jnp.dot(gathered[t * n_eval:(t + 1) * n_eval],
                              w2t_ref[t], preferred_element_type=jnp.float32)
    # ReLU then MaxPool2d((2,2)): max over the 4 pool-window member row blocks
    g = n_eval // 4                                       # B*P2
    h2 = jnp.maximum(jnp.maximum(pre2[:g], pre2[g:2 * g]),
                     jnp.maximum(pre2[2 * g:3 * g], pre2[3 * g:]))
    h2 = jnp.maximum(h2, 0.0)                             # (B*P2, 4), rows = (b, q)

    # ---- Flatten (NCHW) + NacCell((E,), (S,100)), fused weights precomputed -
    # hidden[b, :] = sum_{q, cout} h2[b*P2+q, cout] * w1f[cout*P2+q, :]
    hidden = None
    for q in range(sel_ref.shape[0]):                     # static unroll over P2
        h2_q = jnp.dot(sel_ref[q], h2, preferred_element_type=jnp.float32)   # (B, 4)
        term = jnp.dot(h2_q, w1sub_ref[q], preferred_element_type=jnp.float32)
        hidden = term if hidden is None else hidden + term                   # (B, S*100)

    # ---- PReLU (single shared alpha, SMEM scalar) ----------------------------
    a = alpha_ref[0]
    hidden = jnp.maximum(hidden, 0.0) + a * jnp.minimum(hidden, 0.0)

    # ---- NacCell((S,100), (S,4)) ---------------------------------------------
    y_ref[...] = jnp.dot(hidden, w2f_ref[...], preferred_element_type=jnp.float32)


# ---------------------------------------------------------------------------
# Host-side glue
# ---------------------------------------------------------------------------
def _im2col_conv1(x):
    """(B,4,H,W) -> (4*B*P1, 64) im2col patches for the fused conv1+pool.

    Row order: (pool-window member, batch, pooled position); column order
    matches torch's Conv2d weight flatten (cin, ki, kj).
    # TODO(synk): this remains cheap host-side XLA glue; an in-kernel im2col of
    # the 4x4-conv / stride-2-pool pattern would require strided value slices.
    """
    B, _, H, W = x.shape
    hp, wp = (H - 4 + 1) // 2, (W - 4 + 1) // 2
    wins = []
    for dh in range(2):
        for dw in range(2):
            taps = []
            for i in range(4):
                for j in range(4):
                    sl = x[:, :, dh + i: dh + i + 2 * hp: 2,
                           dw + j: dw + j + 2 * wp: 2]          # (B, 4, hp, wp)
                    taps.append(sl.reshape(B, 4, hp * wp))
            pat = jnp.stack(taps, axis=2)                        # (B, cin, 16, P1)
            pat = pat.reshape(B, 64, hp * wp)                    # k = cin*16 + i*4 + j
            wins.append(jnp.transpose(pat, (0, 2, 1)))           # (B, P1, 64)
    return jnp.stack(wins, axis=0).reshape(4 * B * hp * wp, 64).astype(jnp.float32)


def prepare_params(params, batch, height=16, width=16):
    """One-time (per parameter update) preprocessing:
    reshape conv weights into matmul form, fuse (hoist) the NAC weight
    transforms, and build the constant one-hot matrices implementing conv2
    im2col / pool grouping / NCHW flatten."""
    h1p, w1p = (height - 4 + 1) // 2, (width - 4 + 1) // 2      # pooled map after stage 1
    qh, qw = (h1p - 2 + 1) // 2, (w1p - 2 + 1) // 2             # pooled map after stage 2
    p1, p2 = h1p * w1p, qh * qw

    w1mat = params["w_conv1"].reshape(4, 64).T.astype(jnp.float32)           # (64, 4)
    b1row = params["b_conv1"].reshape(1, 4).astype(jnp.float32)
    # w2t[t, cin, cout] = w_conv2[cout, cin, i, j],  t = i*2 + j
    w2t = jnp.transpose(params["w_conv2"], (2, 3, 1, 0)).reshape(4, 4, 4).astype(jnp.float32)
    b2row = params["b_conv2"].reshape(1, 4).astype(jnp.float32)

    # hoisted NAC (NALU accumulator) weight transforms
    w1f = jnp.tanh(params["what1"]) * jax.nn.sigmoid(params["mhat1"])        # (4*p2, S*100)
    w2f = jnp.tanh(params["what2"]) * jax.nn.sigmoid(params["mhat2"])        # (S*100, S*4)
    # regroup NAC-1 rows by pooled position q so the kernel never has to
    # flatten/transpose:  w1sub[q, cout, :] = w1f[cout*p2 + q, :]
    w1sub = jnp.transpose(w1f.reshape(4, p2, w1f.shape[1]), (1, 0, 2)).astype(jnp.float32)

    # one-hot gather: gathered[t*NE + win2*B*p2 + b*p2 + q, cin] = h1[b*p1 + src, cin]
    n_eval = 4 * batch * p2
    gsel = np.zeros((4 * n_eval, batch * p1), np.float32)
    for i in range(2):
        for j in range(2):
            t = i * 2 + j
            for dy in range(2):
                for dx in range(2):
                    win2 = dy * 2 + dx
                    for b in range(batch):
                        for qy in range(qh):
                            for qx in range(qw):
                                q = qy * qw + qx
                                row = t * n_eval + win2 * batch * p2 + b * p2 + q
                                src = (2 * qy + dy + i) * w1p + (2 * qx + dx + j)
                                gsel[row, b * p1 + src] = 1.0

    # one-hot pooled-position selectors: (sel[q] @ h2)[b, cout] = h2[b*p2+q, cout]
    sel = np.zeros((p2, batch, batch * p2), np.float32)
    for q in range(p2):
        for b in range(batch):
            sel[q, b, b * p2 + q] = 1.0

    return dict(
        w1mat=w1mat, b1row=b1row, w2t=w2t, b2row=b2row,
        gsel=jnp.asarray(gsel), sel=jnp.asarray(sel),
        w1sub=w1sub, w2f=w2f.astype(jnp.float32),
        alpha=params["alpha"].reshape(1).astype(jnp.float32),
    )


def multivariate_decoder_forward(x, kp):
    B = x.shape[0]
    S = N_SYMBOLS
    patches = _im2col_conv1(x)

    vmem = pl.BlockSpec(memory_space=pltpu.MemorySpace.VMEM)
    smem = pl.BlockSpec(memory_space=pltpu.MemorySpace.SMEM)

    y_flat = pl.pallas_call(
        _fused_forward_kernel,
        out_shape=jax.ShapeDtypeStruct((B, S * 4), jnp.float32),
        in_specs=[smem] + [vmem] * 9,
        out_specs=pl.BlockSpec(memory_space=pltpu.MemorySpace.VMEM),
    )(kp["alpha"], patches, kp["w1mat"], kp["b1row"], kp["gsel"],
      kp["w2t"], kp["b2row"], kp["sel"], kp["w1sub"], kp["w2f"])

    return y_flat.reshape(B, S, 4)


# ---------------------------------------------------------------------------
# Pure-XLA reference (for a correctness check only)
# ---------------------------------------------------------------------------
def reference_forward(x, params):
    B = x.shape[0]
    o1 = jax.lax.conv_general_dilated(
        x, params["w_conv1"], (1, 1), "VALID",
        dimension_numbers=("NCHW", "OIHW", "NCHW")) + params["b_conv1"][None, :, None, None]
    o1 = jnp.maximum(o1, 0.0)
    p1 = o1[:, :, :12, :12].reshape(B, 4, 6, 2, 6, 2).max(axis=(3, 5))
    o2 = jax.lax.conv_general_dilated(
        p1, params["w_conv2"], (1, 1), "VALID",
        dimension_numbers=("NCHW", "OIHW", "NCHW")) + params["b_conv2"][None, :, None, None]
    o2 = jnp.maximum(o2, 0.0)
    p2 = o2[:, :, :4, :4].reshape(B, 4, 2, 2, 2, 2).max(axis=(3, 5))
    enc = p2.reshape(B, -1)
    w1f = jnp.tanh(params["what1"]) * jax.nn.sigmoid(params["mhat1"])
    w2f = jnp.tanh(params["what2"]) * jax.nn.sigmoid(params["mhat2"])
    h = enc @ w1f
    a = params["alpha"].reshape(())
    h = jnp.maximum(h, 0.0) + a * jnp.minimum(h, 0.0)
    return (h @ w2f).reshape(B, N_SYMBOLS, 4)


def make_params(key, n_encoder_terms):
    ks = jax.random.split(key, 8)
    s = N_SYMBOLS
    return dict(
        w_conv1=0.1 * jax.random.normal(ks[0], (4, 4, 4, 4), jnp.float32),
        b_conv1=0.1 * jax.random.normal(ks[1], (4,), jnp.float32),
        w_conv2=0.1 * jax.random.normal(ks[2], (4, 4, 2, 2), jnp.float32),
        b_conv2=0.1 * jax.random.normal(ks[3], (4,), jnp.float32),
        what1=0.1 * jax.random.normal(ks[4], (n_encoder_terms, s * 100), jnp.float32),
        mhat1=0.1 * jax.random.normal(ks[5], (n_encoder_terms, s * 100), jnp.float32),
        alpha=jnp.full((1, 1), 0.25, jnp.float32),   # PReLU default init
        what2=0.1 * jax.random.normal(ks[6], (s * 100, s * 4), jnp.float32),
        mhat2=0.1 * jax.random.normal(ks[7], (s * 100, s * 4), jnp.float32),
    )


if __name__ == "__main__":
    key = jax.random.PRNGKey(0)
    k_x, k_p = jax.random.split(key)

    B, C, H, W = 2, 4, 16, 16
    x = jax.random.normal(k_x, (B, C, H, W), jnp.float32)

    # encoder output size for a 16x16 input:
    #   conv4x4 -> 13x13, pool -> 6x6, conv2x2 -> 5x5, pool -> 2x2, flatten -> 4*2*2 = 16
    n_encoder_terms = 4 * 2 * 2

    params = make_params(k_p, n_encoder_terms)
    kparams = prepare_params(params, B, H, W)     # once per parameter update

    fwd = jax.jit(multivariate_decoder_forward)
    y = fwd(x, kparams)
    jax.block_until_ready(y)

    assert y.shape == (B, N_SYMBOLS, 4), y.shape
    assert y.dtype == jnp.float32

    # correctness check against a plain-XLA implementation of the same forward
    y_ref = reference_forward(x, params)
    max_err = float(jnp.max(jnp.abs(y - y_ref)))
    assert bool(jnp.allclose(y, y_ref, atol=1.5e-2, rtol=0.0)), max_err

    print("KERNEL_OK")
</pallas_src>

<mosaic_0001>
module attributes {stable_mosaic.version = 11 : i64} {
  func.func @_fused_forward_kernel(%arg0: memref<1xf32, #tpu.memory_space<smem>>, %arg1: memref<288x64xf32, #tpu.memory_space<vmem>>, %arg2: memref<64x4xf32, #tpu.memory_space<vmem>>, %arg3: memref<1x4xf32, #tpu.memory_space<vmem>>, %arg4: memref<128x72xf32, #tpu.memory_space<vmem>>, %arg5: memref<4x4x4xf32, #tpu.memory_space<vmem>>, %arg6: memref<1x4xf32, #tpu.memory_space<vmem>>, %arg7: memref<4x2x8xf32, #tpu.memory_space<vmem>>, %arg8: memref<4x4x800xf32, #tpu.memory_space<vmem>>, %arg9: memref<800x32xf32, #tpu.memory_space<vmem>>, %arg10: memref<2x32xf32, #tpu.memory_space<vmem>>) attributes {dimension_semantics = [], scalar_prefetch = 0 : i64, scratch_operands = 0 : i64, tpu.core_type = #tpu.core_type<tc>} {
    %c0 = arith.constant 0 : index
    %c0_0 = arith.constant 0 : index
    %0 = vector.load %arg1[%c0, %c0_0] : memref<288x64xf32, #tpu.memory_space<vmem>>, vector<288x64xf32>
    %c0_1 = arith.constant 0 : index
    %c0_2 = arith.constant 0 : index
    %1 = vector.load %arg2[%c0_1, %c0_2] : memref<64x4xf32, #tpu.memory_space<vmem>>, vector<64x4xf32>
    %cst = arith.constant dense<0.000000e+00> : vector<288x4xf32>
    %2 = tpu.matmul %0, %1, %cst {dimension_numbers = #tpu.dot_dimension_numbers<[1], [0], [0], [1], [0, 0, 1, 1], [], []>} : vector<288x64xf32>, vector<64x4xf32>, vector<288x4xf32> -> vector<288x4xf32>
    %c0_3 = arith.constant 0 : index
    %c0_4 = arith.constant 0 : index
    %3 = vector.load %arg3[%c0_3, %c0_4] : memref<1x4xf32, #tpu.memory_space<vmem>>, vector<1x4xf32>
    %4 = vector.broadcast %3 : vector<1x4xf32> to vector<288x4xf32>
    %5 = arith.addf %2, %4 : vector<288x4xf32>
    %6 = vector.extract_strided_slice %5 {offsets = [0, 0], sizes = [72, 4], strides = [1, 1]} : vector<288x4xf32> to vector<72x4xf32>
    %7 = vector.extract_strided_slice %5 {offsets = [72, 0], sizes = [72, 4], strides = [1, 1]} : vector<288x4xf32> to vector<72x4xf32>
    %8 = arith.maximumf %6, %7 : vector<72x4xf32>
    %9 = vector.extract_strided_slice %5 {offsets = [144, 0], sizes = [72, 4], strides = [1, 1]} : vector<288x4xf32> to vector<72x4xf32>
    %10 = vector.extract_strided_slice %5 {offsets = [216, 0], sizes = [72, 4], strides = [1, 1]} : vector<288x4xf32> to vector<72x4xf32>
    %11 = arith.maximumf %9, %10 : vector<72x4xf32>
    %12 = arith.maximumf %8, %11 : vector<72x4xf32>
    %cst_5 = arith.constant 0.000000e+00 : f32
    %13 = vector.broadcast %cst_5 : f32 to vector<72x4xf32>
    %14 = arith.maximumf %12, %13 : vector<72x4xf32>
    %c0_6 = arith.constant 0 : index
    %c0_7 = arith.constant 0 : index
    %15 = vector.load %arg4[%c0_6, %c0_7] : memref<128x72xf32, #tpu.memory_space<vmem>>, vector<128x72xf32>
    %cst_8 = arith.constant dense<0.000000e+00> : vector<128x4xf32>
    %16 = tpu.matmul %15, %14, %cst_8 {dimension_numbers = #tpu.dot_dimension_numbers<[1], [0], [0], [1], [0, 0, 1, 1], [], []>} : vector<128x72xf32>, vector<72x4xf32>, vector<128x4xf32> -> vector<128x4xf32>
    %c0_9 = arith.constant 0 : index
    %c0_10 = arith.constant 0 : index
    %17 = vector.load %arg6[%c0_9, %c0_10] : memref<1x4xf32, #tpu.memory_space<vmem>>, vector<1x4xf32>
    %18 = vector.extract_strided_slice %16 {offsets = [0, 0], sizes = [32, 4], strides = [1, 1]} : vector<128x4xf32> to vector<32x4xf32>
    %c0_11 = arith.constant 0 : index
    %c0_12 = arith.constant 0 : index
    %c0_13 = arith.constant 0 : index
    %19 = vector.load %arg5[%c0_11, %c0_12, %c0_13] : memref<4x4x4xf32, #tpu.memory_space<vmem>>, vector<1x4x4xf32>
    %20 = vector.shape_cast %19 : vector<1x4x4xf32> to vector<4x4xf32>
    %cst_14 = arith.constant dense<0.000000e+00> : vector<32x4xf32>
    %21 = tpu.matmul %18, %20, %cst_14 {dimension_numbers = #tpu.dot_dimension_numbers<[1], [0], [0], [1], [0, 0, 1, 1], [], []>} : vector<32x4xf32>, vector<4x4xf32>, vector<32x4xf32> -> vector<32x4xf32>
    %22 = vector.broadcast %17 : vector<1x4xf32> to vector<32x4xf32>
    %23 = arith.addf %22, %21 : vector<32x4xf32>
    %24 = vector.extract_strided_slice %16 {offsets = [32, 0], sizes = [32, 4], strides = [1, 1]} : vector<128x4xf32> to vector<32x4xf32>
    %c1 = arith.constant 1 : index
    %c0_15 = arith.constant 0 : index
    %c0_16 = arith.constant 0 : index
    %25 = vector.load %arg5[%c1, %c0_15, %c0_16] : memref<4x4x4xf32, #tpu.memory_space<vmem>>, vector<1x4x4xf32>
    %26 = vector.shape_cast %25 : vector<1x4x4xf32> to vector<4x4xf32>
    %cst_17 = arith.constant dense<0.000000e+00> : vector<32x4xf32>
    %27 = tpu.matmul %24, %26, %cst_17 {dimension_numbers = #tpu.dot_dimension_numbers<[1], [0], [0], [1], [0, 0, 1, 1], [], []>} : vector<32x4xf32>, vector<4x4xf32>, vector<32x4xf32> -> vector<32x4xf32>
    %28 = arith.addf %23, %27 : vector<32x4xf32>
    %29 = vector.extract_strided_slice %16 {offsets = [64, 0], sizes = [32, 4], strides = [1, 1]} : vector<128x4xf32> to vector<32x4xf32>
    %c2 = arith.constant 2 : index
    %c0_18 = arith.constant 0 : index
    %c0_19 = arith.constant 0 : index
    %30 = vector.load %arg5[%c2, %c0_18, %c0_19] : memref<4x4x4xf32, #tpu.memory_space<vmem>>, vector<1x4x4xf32>
    %31 = vector.shape_cast %30 : vector<1x4x4xf32> to vector<4x4xf32>
    %cst_20 = arith.constant dense<0.000000e+00> : vector<32x4xf32>
    %32 = tpu.matmul %29, %31, %cst_20 {dimension_numbers = #tpu.dot_dimension_numbers<[1], [0], [0], [1], [0, 0, 1, 1], [], []>} : vector<32x4xf32>, vector<4x4xf32>, vector<32x4xf32> -> vector<32x4xf32>
    %33 = arith.addf %28, %32 : vector<32x4xf32>
    %34 = vector.extract_strided_slice %16 {offsets = [96, 0], sizes = [32, 4], strides = [1, 1]} : vector<128x4xf32> to vector<32x4xf32>
    %c3 = arith.constant 3 : index
    %c0_21 = arith.constant 0 : index
    %c0_22 = arith.constant 0 : index
    %35 = vector.load %arg5[%c3, %c0_21, %c0_22] : memref<4x4x4xf32, #tpu.memory_space<vmem>>, vector<1x4x4xf32>
    %36 = vector.shape_cast %35 : vector<1x4x4xf32> to vector<4x4xf32>
    %cst_23 = arith.constant dense<0.000000e+00> : vector<32x4xf32>
    %37 = tpu.matmul %34, %36, %cst_23 {dimension_numbers = #tpu.dot_dimension_numbers<[1], [0], [0], [1], [0, 0, 1, 1], [], []>} : vector<32x4xf32>, vector<4x4xf32>, vector<32x4xf32> -> vector<32x4xf32>
    %38 = arith.addf %33, %37 : vector<32x4xf32>
    %39 = vector.extract_strided_slice %38 {offsets = [0, 0], sizes = [8, 4], strides = [1, 1]} : vector<32x4xf32> to vector<8x4xf32>
    %40 = vector.extract_strided_slice %38 {offsets = [8, 0], sizes = [8, 4], strides = [1, 1]} : vector<32x4xf32> to vector<8x4xf32>
    %41 = arith.maximumf %39, %40 : vector<8x4xf32>
    %42 = vector.extract_strided_slice %38 {offsets = [16, 0], sizes = [8, 4], strides = [1, 1]} : vector<32x4xf32> to vector<8x4xf32>
    %43 = vector.extract_strided_slice %38 {offsets = [24, 0], sizes = [8, 4], strides = [1, 1]} : vector<32x4xf32> to vector<8x4xf32>
    %44 = arith.maximumf %42, %43 : vector<8x4xf32>
    %45 = arith.maximumf %41, %44 : vector<8x4xf32>
    %cst_24 = arith.constant 0.000000e+00 : f32
    %46 = vector.broadcast %cst_24 : f32 to vector<8x4xf32>
    %47 = arith.maximumf %45, %46 : vector<8x4xf32>
    %c0_25 = arith.constant 0 : index
    %c0_26 = arith.constant 0 : index
    %c0_27 = arith.constant 0 : index
    %48 = vector.load %arg7[%c0_25, %c0_26, %c0_27] : memref<4x2x8xf32, #tpu.memory_space<vmem>>, vector<1x2x8xf32>
    %49 = vector.shape_cast %48 : vector<1x2x8xf32> to vector<2x8xf32>
    %cst_28 = arith.constant dense<0.000000e+00> : vector<2x4xf32>
    %50 = tpu.matmul %49, %47, %cst_28 {dimension_numbers = #tpu.dot_dimension_numbers<[1], [0], [0], [1], [0, 0, 1, 1], [], []>} : vector<2x8xf32>, vector<8x4xf32>, vector<2x4xf32> -> vector<2x4xf32>
    %c0_29 = arith.constant 0 : index
    %c0_30 = arith.constant 0 : index
    %c0_31 = arith.constant 0 : index
    %51 = vector.load %arg8[%c0_29, %c0_30, %c0_31] : memref<4x4x800xf32, #tpu.memory_space<vmem>>, vector<1x4x800xf32>
    %52 = vector.shape_cast %51 : vector<1x4x800xf32> to vector<4x800xf32>
    %cst_32 = arith.constant dense<0.000000e+00> : vector<2x800xf32>
    %53 = tpu.matmul %50, %52, %cst_32 {dimension_numbers = #tpu.dot_dimension_numbers<[1], [0], [0], [1], [0, 0, 1, 1], [], []>} : vector<2x4xf32>, vector<4x800xf32>, vector<2x800xf32> -> vector<2x800xf32>
    %c1_33 = arith.constant 1 : index
    %c0_34 = arith.constant 0 : index
    %c0_35 = arith.constant 0 : index
    %54 = vector.load %arg7[%c1_33, %c0_34, %c0_35] : memref<4x2x8xf32, #tpu.memory_space<vmem>>, vector<1x2x8xf32>
    %55 = vector.shape_cast %54 : vector<1x2x8xf32> to vector<2x8xf32>
    %cst_36 = arith.constant dense<0.000000e+00> : vector<2x4xf32>
    %56 = tpu.matmul %55, %47, %cst_36 {dimension_numbers = #tpu.dot_dimension_numbers<[1], [0], [0], [1], [0, 0, 1, 1], [], []>} : vector<2x8xf32>, vector<8x4xf32>, vector<2x4xf32> -> vector<2x4xf32>
    %c1_37 = arith.constant 1 : index
    %c0_38 = arith.constant 0 : index
    %c0_39 = arith.constant 0 : index
    %57 = vector.load %arg8[%c1_37, %c0_38, %c0_39] : memref<4x4x800xf32, #tpu.memory_space<vmem>>, vector<1x4x800xf32>
    %58 = vector.shape_cast %57 : vector<1x4x800xf32> to vector<4x800xf32>
    %cst_40 = arith.constant dense<0.000000e+00> : vector<2x800xf32>
    %59 = tpu.matmul %56, %58, %cst_40 {dimension_numbers = #tpu.dot_dimension_numbers<[1], [0], [0], [1], [0, 0, 1, 1], [], []>} : vector<2x4xf32>, vector<4x800xf32>, vector<2x800xf32> -> vector<2x800xf32>
    %60 = arith.addf %53, %59 : vector<2x800xf32>
    %c2_41 = arith.constant 2 : index
    %c0_42 = arith.constant 0 : index
    %c0_43 = arith.constant 0 : index
    %61 = vector.load %arg7[%c2_41, %c0_42, %c0_43] : memref<4x2x8xf32, #tpu.memory_space<vmem>>, vector<1x2x8xf32>
    %62 = vector.shape_cast %61 : vector<1x2x8xf32> to vector<2x8xf32>
    %cst_44 = arith.constant dense<0.000000e+00> : vector<2x4xf32>
    %63 = tpu.matmul %62, %47, %cst_44 {dimension_numbers = #tpu.dot_dimension_numbers<[1], [0], [0], [1], [0, 0, 1, 1], [], []>} : vector<2x8xf32>, vector<8x4xf32>, vector<2x4xf32> -> vector<2x4xf32>
    %c2_45 = arith.constant 2 : index
    %c0_46 = arith.constant 0 : index
    %c0_47 = arith.constant 0 : index
    %64 = vector.load %arg8[%c2_45, %c0_46, %c0_47] : memref<4x4x800xf32, #tpu.memory_space<vmem>>, vector<1x4x800xf32>
    %65 = vector.shape_cast %64 : vector<1x4x800xf32> to vector<4x800xf32>
    %cst_48 = arith.constant dense<0.000000e+00> : vector<2x800xf32>
    %66 = tpu.matmul %63, %65, %cst_48 {dimension_numbers = #tpu.dot_dimension_numbers<[1], [0], [0], [1], [0, 0, 1, 1], [], []>} : vector<2x4xf32>, vector<4x800xf32>, vector<2x800xf32> -> vector<2x800xf32>
    %67 = arith.addf %60, %66 : vector<2x800xf32>
    %c3_49 = arith.constant 3 : index
    %c0_50 = arith.constant 0 : index
    %c0_51 = arith.constant 0 : index
    %68 = vector.load %arg7[%c3_49, %c0_50, %c0_51] : memref<4x2x8xf32, #tpu.memory_space<vmem>>, vector<1x2x8xf32>
    %69 = vector.shape_cast %68 : vector<1x2x8xf32> to vector<2x8xf32>
    %cst_52 = arith.constant dense<0.000000e+00> : vector<2x4xf32>
    %70 = tpu.matmul %69, %47, %cst_52 {dimension_numbers = #tpu.dot_dimension_numbers<[1], [0], [0], [1], [0, 0, 1, 1], [], []>} : vector<2x8xf32>, vector<8x4xf32>, vector<2x4xf32> -> vector<2x4xf32>
    %c3_53 = arith.constant 3 : index
    %c0_54 = arith.constant 0 : index
    %c0_55 = arith.constant 0 : index
    %71 = vector.load %arg8[%c3_53, %c0_54, %c0_55] : memref<4x4x800xf32, #tpu.memory_space<vmem>>, vector<1x4x800xf32>
    %72 = vector.shape_cast %71 : vector<1x4x800xf32> to vector<4x800xf32>
    %cst_56 = arith.constant dense<0.000000e+00> : vector<2x800xf32>
    %73 = tpu.matmul %70, %72, %cst_56 {dimension_numbers = #tpu.dot_dimension_numbers<[1], [0], [0], [1], [0, 0, 1, 1], [], []>} : vector<2x4xf32>, vector<4x800xf32>, vector<2x800xf32> -> vector<2x800xf32>
    %74 = arith.addf %67, %73 : vector<2x800xf32>
    %c0_57 = arith.constant 0 : index
    %75 = memref.load %arg0[%c0_57] : memref<1xf32, #tpu.memory_space<smem>>
    %cst_58 = arith.constant 0.000000e+00 : f32
    %76 = vector.broadcast %cst_58 : f32 to vector<2x800xf32>
    %77 = arith.maximumf %74, %76 : vector<2x800xf32>
    %cst_59 = arith.constant 0.000000e+00 : f32
    %78 = vector.broadcast %cst_59 : f32 to vector<2x800xf32>
    %79 = arith.minimumf %74, %78 : vector<2x800xf32>
    %80 = vector.broadcast %75 : f32 to vector<2x800xf32>
    %81 = arith.mulf %80, %79 : vector<2x800xf32>
    %82 = arith.addf %77, %81 : vector<2x800xf32>
    %c0_60 = arith.constant 0 : index
    %c0_61 = arith.constant 0 : index
    %83 = vector.load %arg9[%c0_60, %c0_61] : memref<800x32xf32, #tpu.memory_space<vmem>>, vector<800x32xf32>
    %cst_62 = arith.constant dense<0.000000e+00> : vector<2x32xf32>
    %84 = tpu.matmul %82, %83, %cst_62 {dimension_numbers = #tpu.dot_dimension_numbers<[1], [0], [0], [1], [0, 0, 1, 1], [], []>} : vector<2x800xf32>, vector<800x32xf32>, vector<2x32xf32> -> vector<2x32xf32>
    %c0_63 = arith.constant 0 : index
    %c0_64 = arith.constant 0 : index
    %85 = vector.load %arg10[%c0_63, %c0_64] : memref<2x32xf32, #tpu.memory_space<vmem>>, vector<2x32xf32>
    tpu.vector_store %arg10[%c0_63, %c0_64], %84 {strides = array<i32>} : memref<2x32xf32, #tpu.memory_space<vmem>>, vector<2x32xf32>,
    return
  }
}

</mosaic_0001>

<llo_original>
// kernel: multivariate_decoder_forward.1
$region0: #{multivariate_decoder_forward.1}
  #allocation0 [shape = 'u32[]', space=smem, size = 0x4, offset = 0x4, fixed_abs, tag = 'smem constant byte address 0x4 - core index']
  #allocation1 [shape = 'u32[72,128]{1,0:T(1,128)}', space=vmem, size = 0x9000, scoped, tag = 'internal scratch']
  #allocation2 [shape = 'f32[1]{0:T(128)S(6)}', space=smem, size = 0x200, scoped, tag = 'scoped memory for multivariate_decoder_forward.1']
  %s0 = inlined_call_operand.<no memory space> [shape: f32[1], index: 0, kind: input, shape index: {}]
  %s1 = inlined_call_operand.vmem [shape: f32[288,64], index: 1, kind: input, shape index: {}]
  %s2 = inlined_call_operand.vmem [shape: f32[64,4], index: 2, kind: input, shape index: {}]
  %s3 = inlined_call_operand.vmem [shape: f32[1,4], index: 3, kind: input, shape index: {}]
  %s4 = inlined_call_operand.vmem [shape: f32[128,72], index: 4, kind: input, shape index: {}]
  %s5 = inlined_call_operand.vmem [shape: f32[4,4,4], index: 5, kind: input, shape index: {}]
  %s6 = inlined_call_operand.vmem [shape: f32[1,4], index: 6, kind: input, shape index: {}]
  %s7 = inlined_call_operand.vmem [shape: f32[4,2,8], index: 7, kind: input, shape index: {}]
  %s8 = inlined_call_operand.vmem [shape: f32[4,4,800], index: 8, kind: input, shape index: {}]
  %s9 = inlined_call_operand.vmem [shape: f32[800,32], index: 9, kind: input, shape index: {}]
  %s10 = inlined_call_operand.vmem [shape: f32[2,32], index: 10, kind: output, shape index: {}]
  %s11 = sld [smem:[#allocation0]]
  $region50: #{multivariate_decoder_forward.1} parent=0
    _
  %s13 = ssub.s32 1, %s11
  %s14 = scalar_select 0, %s13, %s11
  %15 = sst [smem:[#allocation2]] %s0
  // Predicated region
  $region2: #{multivariate_decoder_forward.1} parent=0 // pred_check
    _
  $region3: #{multivariate_decoder_forward.1} parent=0 // pred_check_branch
    %17 = sbr.rel (0) target = $region5
  $region4: #{multivariate_decoder_forward.1} parent=0 // pred_region
    _
  $region5: #{multivariate_decoder_forward.1} parent=0 // pred_fallthru
    _
  // Predicated region
  $region6: #{multivariate_decoder_forward.1} parent=0 // pred_check
    _
  $region7: #{multivariate_decoder_forward.1} parent=0 // pred_check_branch
    %19 = sbr.rel (0) target = $region9
  $region8: #{multivariate_decoder_forward.1} parent=0 // pred_region
    _
  $region9: #{multivariate_decoder_forward.1} parent=0 // pred_fallthru
    _
  // Predicated region
  $region10: #{multivariate_decoder_forward.1} parent=0 // pred_check
    _
  $region11: #{multivariate_decoder_forward.1} parent=0 // pred_check_branch
    %21 = sbr.rel (0) target = $region13
  $region12: #{multivariate_decoder_forward.1} parent=0 // pred_region
    _
  $region13: #{multivariate_decoder_forward.1} parent=0 // pred_fallthru
    _
  // Predicated region
  $region14: #{multivariate_decoder_forward.1} parent=0 // pred_check
    _
  $region15: #{multivariate_decoder_forward.1} parent=0 // pred_check_branch
    %23 = sbr.rel (0) target = $region17
  $region16: #{multivariate_decoder_forward.1} parent=0 // pred_region
    _
  $region17: #{multivariate_decoder_forward.1} parent=0 // pred_fallthru
    _
  // Predicated region
  $region18: #{multivariate_decoder_forward.1} parent=0 // pred_check
    _
  $region19: #{multivariate_decoder_forward.1} parent=0 // pred_check_branch
    %25 = sbr.rel (0) target = $region21
  $region20: #{multivariate_decoder_forward.1} parent=0 // pred_region
    _
  $region21: #{multivariate_decoder_forward.1} parent=0 // pred_fallthru
    _
  // Predicated region
  $region22: #{multivariate_decoder_forward.1} parent=0 // pred_check
    _
  $region23: #{multivariate_decoder_forward.1} parent=0 // pred_check_branch
    %27 = sbr.rel (0) target = $region25
  $region24: #{multivariate_decoder_forward.1} parent=0 // pred_region
    _
  $region25: #{multivariate_decoder_forward.1} parent=0 // pred_fallthru
    _
  // Predicated region
  $region26: #{multivariate_decoder_forward.1} parent=0 // pred_check
    _
  $region27: #{multivariate_decoder_forward.1} parent=0 // pred_check_branch
    %29 = sbr.rel (0) target = $region29
  $region28: #{multivariate_decoder_forward.1} parent=0 // pred_region
    _
  $region29: #{multivariate_decoder_forward.1} parent=0 // pred_fallthru
    _
  // Predicated region
  $region30: #{multivariate_decoder_forward.1} parent=0 // pred_check
    _
  $region31: #{multivariate_decoder_forward.1} parent=0 // pred_check_branch
    %31 = sbr.rel (0) target = $region33
  $region32: #{multivariate_decoder_forward.1} parent=0 // pred_region
    _
  $region33: #{multivariate_decoder_forward.1} parent=0 // pred_fallthru
    _
  // Predicated region
  $region34: #{multivariate_decoder_forward.1} parent=0 // pred_check
    _
  $region35: #{multivariate_decoder_forward.1} parent=0 // pred_check_branch
    %33 = sbr.rel (0) target = $region37
  $region36: #{multivariate_decoder_forward.1} parent=0 // pred_region
    _
  $region37: #{multivariate_decoder_forward.1} parent=0 // pred_fallthru
    _
  // Predicated region
  $region38: #{multivariate_decoder_forward.1} parent=0 // pred_check
    _
  $region39: #{multivariate_decoder_forward.1} parent=0 // pred_check_branch
    %35 = sbr.rel (0) target = $region41
  $region40: #{multivariate_decoder_forward.1} parent=0 // pred_region
    _
  $region41: #{multivariate_decoder_forward.1} parent=0 // pred_fallthru
    _
  %v36 = vld [vmem:[%s1] sm:$0xff]
  %v37 = vld [vmem:[%s1 + $0x8] sm:$0xff]
  %v38 = vld [vmem:[%s1 + $0x10] sm:$0xff]
  %v39 = vld [vmem:[%s1 + $0x18] sm:$0xff]
  %v40 = vld [vmem:[%s1 + $0x20] sm:$0xff]
  %v41 = vld [vmem:[%s1 + $0x28] sm:$0xff]
  %v42 = vld [vmem:[%s1 + $0x30] sm:$0xff]
  %v43 = vld [vmem:[%s1 + $0x38] sm:$0xff]
  %v44 = vld [vmem:[%s1 + $0x40] sm:$0xff]
  %v45 = vld [vmem:[%s1 + $0x48] sm:$0xff]
  %v46 = vld [vmem:[%s1 + $0x50] sm:$0xff]
  %v47 = vld [vmem:[%s1 + $0x58] sm:$0xff]
  %v48 = vld [vmem:[%s1 + $0x60] sm:$0xff]
  %v49 = vld [vmem:[%s1 + $0x68] sm:$0xff]
  %v50 = vld [vmem:[%s1 + $0x70] sm:$0xff]
  %v51 = vld [vmem:[%s1 + $0x78] sm:$0xff]
  %v52 = vld [vmem:[%s1 + $0x80] sm:$0xff]
  %v53 = vld [vmem:[%s1 + $0x88] sm:$0xff]
  %v54 = vld [vmem:[%s1 + $0x90] sm:$0xff]
  %v55 = vld [vmem:[%s1 + $0x98] sm:$0xff]
  %v56 = vld [vmem:[%s1 + $0xa0] sm:$0xff]
  %v57 = vld [vmem:[%s1 + $0xa8] sm:$0xff]
  %v58 = vld [vmem:[%s1 + $0xb0] sm:$0xff]
  %v59 = vld [vmem:[%s1 + $0xb8] sm:$0xff]
  %v60 = vld [vmem:[%s1 + $0xc0] sm:$0xff]
  %v61 = vld [vmem:[%s1 + $0xc8] sm:$0xff]
  %v62 = vld [vmem:[%s1 + $0xd0] sm:$0xff]
  %v63 = vld [vmem:[%s1 + $0xd8] sm:$0xff]
  %v64 = vld [vmem:[%s1 + $0xe0] sm:$0xff]
  %v65 = vld [vmem:[%s1 + $0xe8] sm:$0xff]
  %v66 = vld [vmem:[%s1 + $0xf0] sm:$0xff]
  %v67 = vld [vmem:[%s1 + $0xf8] sm:$0xff]
  %v68 = vld [vmem:[%s1 + $0x100] sm:$0xff]
  %v69 = vld [vmem:[%s1 + $0x108] sm:$0xff]
  %v70 = vld [vmem:[%s1 + $0x110] sm:$0xff]
  %v71 = vld [vmem:[%s1 + $0x118] sm:$0xff]
  %v72 = vld [vmem:[%s2] sm:$0xff]
  %v73 = vld [vmem:[%s2 + $0x8] sm:$0xff]
  %v74 = vld [vmem:[%s2 + $0x10] sm:$0xff]
  %v75 = vld [vmem:[%s2 + $0x18] sm:$0xff]
  %v76 = vld [vmem:[%s2 + $0x20] sm:$0xff]
  %v77 = vld [vmem:[%s2 + $0x28] sm:$0xff]
  %v78 = vld [vmem:[%s2 + $0x30] sm:$0xff]
  %v79 = vld [vmem:[%s2 + $0x38] sm:$0xff]
  %v80 = vld [vmem:[%s3] sm:$0x1]
  %v82 = vperm.slane %v80, 0
  %vm84 = vcmask 523264
  %v86 = vsel %vm84, %v36, 0
  %v89 = vsel %vm84, %v37, 0
  %v92 = vsel %vm84, %v38, 0
  %v95 = vsel %vm84, %v39, 0
  %v98 = vsel %vm84, %v40, 0
  %v101 = vsel %vm84, %v41, 0
  %v104 = vsel %vm84, %v42, 0
  %v107 = vsel %vm84, %v43, 0
  %v110 = vsel %vm84, %v44, 0
  %v113 = vsel %vm84, %v45, 0
  %v116 = vsel %vm84, %v46, 0
  %v119 = vsel %vm84, %v47, 0
  %v122 = vsel %vm84, %v48, 0
  %v125 = vsel %vm84, %v49, 0
  %v128 = vsel %vm84, %v50, 0
  %v131 = vsel %vm84, %v51, 0
  %v134 = vsel %vm84, %v52, 0
  %v137 = vsel %vm84, %v53, 0
  %v140 = vsel %vm84, %v54, 0
  %v143 = vsel %vm84, %v55, 0
  %v146 = vsel %vm84, %v56, 0
  %v149 = vsel %vm84, %v57, 0
  %v152 = vsel %vm84, %v58, 0
  %v155 = vsel %vm84, %v59, 0
  %v158 = vsel %vm84, %v60, 0
  %v161 = vsel %vm84, %v61, 0
  %v164 = vsel %vm84, %v62, 0
  %v167 = vsel %vm84, %v63, 0
  %v170 = vsel %vm84, %v64, 0
  %v173 = vsel %vm84, %v65, 0
  %v176 = vsel %vm84, %v66, 0
  %v179 = vsel %vm84, %v67, 0
  %v182 = vsel %vm84, %v68, 0
  %v185 = vsel %vm84, %v69, 0
  %v188 = vsel %vm84, %v70, 0
  %v191 = vsel %vm84, %v71, 0
  %193 = vmatpush.msra.mxu0 0.0
  %194 = vmatpush.msra.mxu0 0.0
  %195 = vmatpush.msra.mxu0 0.0
  %196 = vmatpush.msra.mxu0 0.0
  %197 = vmatpush.msra.mxu0 0.0
  %198 = vmatpush.msra.mxu0 0.0
  %199 = vmatpush.msra.mxu0 0.0
  %200 = vmatpush.msra.mxu0 0.0
  %201 = vmatpush.msra.mxu0 %v79
  %202 = vmatpush.msra.mxu0 %v78
  %203 = vmatpush.msra.mxu0 %v77
  %204 = vmatpush.msra.mxu0 %v76
  %205 = vmatpush.msra.mxu0 %v75
  %206 = vmatpush.msra.mxu0 %v74
  %207 = vmatpush.msra.mxu0 %v73
  %208 = vmatpush.msra.mxu0 %v72
  %209 = vmatmul.f32.gmra.mxu0 %v86
  %v210 = vpop.f32.mrf.mxu0
  %v211 = vadd.f32 %v82, %v210
  %212 = vmatmul.f32.gmra.mxu0 %v89
  %v213 = vpop.f32.mrf.mxu0
  %v214 = vadd.f32 %v82, %v213
  %215 = vmatmul.f32.gmra.mxu0 %v92
  %v216 = vpop.f32.mrf.mxu0
  %v217 = vadd.f32 %v82, %v216
  %218 = vmatmul.f32.gmra.mxu0 %v95
  %v219 = vpop.f32.mrf.mxu0
  %v220 = vadd.f32 %v82, %v219
  %221 = vmatmul.f32.gmra.mxu0 %v98
  %v222 = vpop.f32.mrf.mxu0
  %v223 = vadd.f32 %v82, %v222
  %224 = vmatmul.f32.gmra.mxu0 %v101
  %v225 = vpop.f32.mrf.mxu0
  %v226 = vadd.f32 %v82, %v225
  %227 = vmatmul.f32.gmra.mxu0 %v104
  %v228 = vpop.f32.mrf.mxu0
  %v229 = vadd.f32 %v82, %v228
  %230 = vmatmul.f32.gmra.mxu0 %v107
  %v231 = vpop.f32.mrf.mxu0
  %v232 = vadd.f32 %v82, %v231
  %233 = vmatmul.f32.gmra.mxu0 %v110
  %v234 = vpop.f32.mrf.mxu0
  %v235 = vadd.f32 %v82, %v234
  %236 = vmatmul.f32.gmra.mxu0 %v113
  %v237 = vpop.f32.mrf.mxu0
  %v238 = vadd.f32 %v82, %v237
  %239 = vmatmul.f32.gmra.mxu0 %v116
  %v240 = vpop.f32.mrf.mxu0
  %v241 = vadd.f32 %v82, %v240
  %242 = vmatmul.f32.gmra.mxu0 %v119
  %v243 = vpop.f32.mrf.mxu0
  %v244 = vadd.f32 %v82, %v243
  %245 = vmatmul.f32.gmra.mxu0 %v122
  %v246 = vpop.f32.mrf.mxu0
  %v247 = vadd.f32 %v82, %v246
  %248 = vmatmul.f32.gmra.mxu0 %v125
  %v249 = vpop.f32.mrf.mxu0
  %v250 = vadd.f32 %v82, %v249
  %251 = vmatmul.f32.gmra.mxu0 %v128
  %v252 = vpop.f32.mrf.mxu0
  %v253 = vadd.f32 %v82, %v252
  %254 = vmatmul.f32.gmra.mxu0 %v131
  %v255 = vpop.f32.mrf.mxu0
  %v256 = vadd.f32 %v82, %v255
  %257 = vmatmul.f32.gmra.mxu0 %v134
  %v258 = vpop.f32.mrf.mxu0
  %v259 = vadd.f32 %v82, %v258
  %260 = vmatmul.f32.gmra.mxu0 %v137
  %v261 = vpop.f32.mrf.mxu0
  %v262 = vadd.f32 %v82, %v261
  %263 = vmatmul.f32.gmra.mxu0 %v140
  %v264 = vpop.f32.mrf.mxu0
  %v265 = vadd.f32 %v82, %v264
  %266 = vmatmul.f32.gmra.mxu0 %v143
  %v267 = vpop.f32.mrf.mxu0
  %v268 = vadd.f32 %v82, %v267
  %269 = vmatmul.f32.gmra.mxu0 %v146
  %v270 = vpop.f32.mrf.mxu0
  %v271 = vadd.f32 %v82, %v270
  %272 = vmatmul.f32.gmra.mxu0 %v149
  %v273 = vpop.f32.mrf.mxu0
  %v274 = vadd.f32 %v82, %v273
  %275 = vmatmul.f32.gmra.mxu0 %v152
  %v276 = vpop.f32.mrf.mxu0
  %v277 = vadd.f32 %v82, %v276
  %278 = vmatmul.f32.gmra.mxu0 %v155
  %v279 = vpop.f32.mrf.mxu0
  %v280 = vadd.f32 %v82, %v279
  %281 = vmatmul.f32.gmra.mxu0 %v158
  %v282 = vpop.f32.mrf.mxu0
  %v283 = vadd.f32 %v82, %v282
  %284 = vmatmul.f32.gmra.mxu0 %v161
  %v285 = vpop.f32.mrf.mxu0
  %v286 = vadd.f32 %v82, %v285
  %287 = vmatmul.f32.gmra.mxu0 %v164
  %v288 = vpop.f32.mrf.mxu0
  %v289 = vadd.f32 %v82, %v288
  %290 = vmatmul.f32.gmra.mxu0 %v167
  %v291 = vpop.f32.mrf.mxu0
  %v292 = vadd.f32 %v82, %v291
  %293 = vmatmul.f32.gmra.mxu0 %v170
  %v294 = vpop.f32.mrf.mxu0
  %v295 = vadd.f32 %v82, %v294
  %296 = vmatmul.f32.gmra.mxu0 %v173
  %v297 = vpop.f32.mrf.mxu0
  %v298 = vadd.f32 %v82, %v297
  %299 = vmatmul.f32.gmra.mxu0 %v176
  %v300 = vpop.f32.mrf.mxu0
  %v301 = vadd.f32 %v82, %v300
  %302 = vmatmul.f32.gmra.mxu0 %v179
  %v303 = vpop.f32.mrf.mxu0
  %v304 = vadd.f32 %v82, %v303
  %305 = vmatmul.f32.gmra.mxu0 %v182
  %v306 = vpop.f32.mrf.mxu0
  %v307 = vadd.f32 %v82, %v306
  %308 = vmatmul.f32.gmra.mxu0 %v185
  %v309 = vpop.f32.mrf.mxu0
  %v310 = vadd.f32 %v82, %v309
  %311 = vmatmul.f32.gmra.mxu0 %v188
  %v312 = vpop.f32.mrf.mxu0
  %v313 = vadd.f32 %v82, %v312
  %314 = vmatmul.f32.gmra.mxu0 %v191
  %v315 = vpop.f32.mrf.mxu0
  %v316 = vadd.f32 %v82, %v315
  %317 = vdwg.mxu0
  %v318 = vmax.f32 %v211, %v238
  %v319 = vmax.f32 %v214, %v241
  %v320 = vmax.f32 %v217, %v244
  %v321 = vmax.f32 %v220, %v247
  %v322 = vmax.f32 %v223, %v250
  %v323 = vmax.f32 %v226, %v253
  %v324 = vmax.f32 %v229, %v256
  %v325 = vmax.f32 %v232, %v259
  %v326 = vmax.f32 %v235, %v262
  %v327 = vmax.f32 %v265, %v292
  %v328 = vmax.f32 %v268, %v295
  %v329 = vmax.f32 %v271, %v298
  %v330 = vmax.f32 %v274, %v301
  %v331 = vmax.f32 %v277, %v304
  %v332 = vmax.f32 %v280, %v307
  %v333 = vmax.f32 %v283, %v310
  %v334 = vmax.f32 %v286, %v313
  %v335 = vmax.f32 %v289, %v316
  %v336 = vmax.f32 %v318, %v327
  %v337 = vmax.f32 %v319, %v328
  %v338 = vmax.f32 %v320, %v329
  %v339 = vmax.f32 %v321, %v330
  %v340 = vmax.f32 %v322, %v331
  %v341 = vmax.f32 %v323, %v332
  %v342 = vmax.f32 %v324, %v333
  %v343 = vmax.f32 %v325, %v334
  %v344 = vmax.f32 %v326, %v335
  %v345 = vmax.f32 %v336, 0.0
  %v346 = vmax.f32 %v337, 0.0
  %v347 = vmax.f32 %v338, 0.0
  %v348 = vmax.f32 %v339, 0.0
  %v349 = vmax.f32 %v340, 0.0
  %v350 = vmax.f32 %v341, 0.0
  %v351 = vmax.f32 %v342, 0.0
  %v352 = vmax.f32 %v343, 0.0
  %v353 = vmax.f32 %v344, 0.0
  %v354 = vld [vmem:[%s4] sm:$0xff]
  %v355 = vld [vmem:[%s4 + $0x8] sm:$0xff]
  %v356 = vld [vmem:[%s4 + $0x10] sm:$0xff]
  %v357 = vld [vmem:[%s4 + $0x18] sm:$0xff]
  %v358 = vld [vmem:[%s4 + $0x20] sm:$0xff]
  %v359 = vld [vmem:[%s4 + $0x28] sm:$0xff]
  %v360 = vld [vmem:[%s4 + $0x30] sm:$0xff]
  %v361 = vld [vmem:[%s4 + $0x38] sm:$0xff]
  %v362 = vld [vmem:[%s4 + $0x40] sm:$0xff]
  %v363 = vld [vmem:[%s4 + $0x48] sm:$0xff]
  %v364 = vld [vmem:[%s4 + $0x50] sm:$0xff]
  %v365 = vld [vmem:[%s4 + $0x58] sm:$0xff]
  %v366 = vld [vmem:[%s4 + $0x60] sm:$0xff]
  %v367 = vld [vmem:[%s4 + $0x68] sm:$0xff]
  %v368 = vld [vmem:[%s4 + $0x70] sm:$0xff]
  %v369 = vld [vmem:[%s4 + $0x78] sm:$0xff]
  %vm370 = vcmask 588800
  %v372 = vsel %vm370, %v354, 0
  %v375 = vsel %vm370, %v355, 0
  %v378 = vsel %vm370, %v356, 0
  %v381 = vsel %vm370, %v357, 0
  %v384 = vsel %vm370, %v358, 0
  %v387 = vsel %vm370, %v359, 0
  %v390 = vsel %vm370, %v360, 0
  %v393 = vsel %vm370, %v361, 0
  %v396 = vsel %vm370, %v362, 0
  %v399 = vsel %vm370, %v363, 0
  %v402 = vsel %vm370, %v364, 0
  %v405 = vsel %vm370, %v365, 0
  %v408 = vsel %vm370, %v366, 0
  %v411 = vsel %vm370, %v367, 0
  %v414 = vsel %vm370, %v368, 0
  %v417 = vsel %vm370, %v369, 0
  %419 = vmatpush.msra.mxu0 0.0
  %420 = vmatpush.msra.mxu0 0.0
  %421 = vmatpush.msra.mxu0 0.0
  %422 = vmatpush.msra.mxu0 0.0
  %423 = vmatpush.msra.mxu0 0.0
  %424 = vmatpush.msra.mxu0 0.0
  %425 = vmatpush.msra.mxu0 0.0
  %426 = vmatpush.msra.mxu0 %v353
  %427 = vmatpush.msra.mxu0 %v352
  %428 = vmatpush.msra.mxu0 %v351
  %429 = vmatpush.msra.mxu0 %v350
  %430 = vmatpush.msra.mxu0 %v349
  %431 = vmatpush.msra.mxu0 %v348
  %432 = vmatpush.msra.mxu0 %v347
  %433 = vmatpush.msra.mxu0 %v346
  %434 = vmatpush.msra.mxu0 %v345
  %435 = vmatmul.f32.gmra.mxu0 %v372
  %v436 = vpop.f32.mrf.mxu0
  %v437 = vadd.f32 0.0, %v436
  %438 = vmatmul.f32.gmra.mxu0 %v375
  %v439 = vpop.f32.mrf.mxu0
  %v440 = vadd.f32 0.0, %v439
  %441 = vmatmul.f32.gmra.mxu0 %v378
  %v442 = vpop.f32.mrf.mxu0
  %v443 = vadd.f32 0.0, %v442
  %444 = vmatmul.f32.gmra.mxu0 %v381
  %v445 = vpop.f32.mrf.mxu0
  %v446 = vadd.f32 0.0, %v445
  %447 = vmatmul.f32.gmra.mxu0 %v384
  %v448 = vpop.f32.mrf.mxu0
  %v449 = vadd.f32 0.0, %v448
  %450 = vmatmul.f32.gmra.mxu0 %v387
  %v451 = vpop.f32.mrf.mxu0
  %v452 = vadd.f32 0.0, %v451
  %453 = vmatmul.f32.gmra.mxu0 %v390
  %v454 = vpop.f32.mrf.mxu0
  %v455 = vadd.f32 0.0, %v454
  %456 = vmatmul.f32.gmra.mxu0 %v393
  %v457 = vpop.f32.mrf.mxu0
  %v458 = vadd.f32 0.0, %v457
  %459 = vmatmul.f32.gmra.mxu0 %v396
  %v460 = vpop.f32.mrf.mxu0
  %v461 = vadd.f32 0.0, %v460
  %462 = vmatmul.f32.gmra.mxu0 %v399
  %v463 = vpop.f32.mrf.mxu0
  %v464 = vadd.f32 0.0, %v463
  %465 = vmatmul.f32.gmra.mxu0 %v402
  %v466 = vpop.f32.mrf.mxu0
  %v467 = vadd.f32 0.0, %v466
  %468 = vmatmul.f32.gmra.mxu0 %v405
  %v469 = vpop.f32.mrf.mxu0
  %v470 = vadd.f32 0.0, %v469
  %471 = vmatmul.f32.gmra.mxu0 %v408
  %v472 = vpop.f32.mrf.mxu0
  %v473 = vadd.f32 0.0, %v472
  %474 = vmatmul.f32.gmra.mxu0 %v411
  %v475 = vpop.f32.mrf.mxu0
  %v476 = vadd.f32 0.0, %v475
  %477 = vmatmul.f32.gmra.mxu0 %v414
  %v478 = vpop.f32.mrf.mxu0
  %v479 = vadd.f32 0.0, %v478
  %480 = vmatmul.f32.gmra.mxu0 %v417
  %v481 = vpop.f32.mrf.mxu0
  %v482 = vadd.f32 0.0, %v481
  %483 = vdwg.mxu0
  %v484 = vld [vmem:[%s6] sm:$0x1]
  %v485 = vld [vmem:[%s5] sm:$0xf]
  %vm486 = vcmask 31744
  %v488 = vsel %vm486, %v437, 0
  %v491 = vsel %vm486, %v440, 0
  %v494 = vsel %vm486, %v443, 0
  %v497 = vsel %vm486, %v446, 0
  %vm499 = vcmask 1043456
  %v501 = vsel %vm499, %v485, 0
  %503 = vmatpush.msra.mxu0 0.0
  %504 = vmatpush.msra.mxu0 0.0
  %505 = vmatpush.msra.mxu0 0.0
  %506 = vmatpush.msra.mxu0 0.0
  %507 = vmatpush.msra.mxu0 0.0
  %508 = vmatpush.msra.mxu0 0.0
  %509 = vmatpush.msra.mxu0 0.0
  %510 = vmatpush.msra.mxu0 0.0
  %511 = vmatpush.msra.mxu0 0.0
  %512 = vmatpush.msra.mxu0 0.0
  %513 = vmatpush.msra.mxu0 0.0
  %514 = vmatpush.msra.mxu0 0.0
  %515 = vmatpush.msra.mxu0 0.0
  %516 = vmatpush.msra.mxu0 0.0
  %517 = vmatpush.msra.mxu0 0.0
  %518 = vmatpush.msra.mxu0 %v501
  %519 = vmatmul.f32.gmra.mxu0 %v488
  %v520 = vpop.f32.mrf.mxu0
  %v521 = vadd.f32 0.0, %v520
  %522 = vmatmul.f32.gmra.mxu0 %v491
  %v523 = vpop.f32.mrf.mxu0
  %v524 = vadd.f32 0.0, %v523
  %525 = vmatmul.f32.gmra.mxu0 %v494
  %v526 = vpop.f32.mrf.mxu0
  %v527 = vadd.f32 0.0, %v526
  %528 = vmatmul.f32.gmra.mxu0 %v497
  %v529 = vpop.f32.mrf.mxu0
  %v530 = vadd.f32 0.0, %v529
  %531 = vdwg.mxu0
  %v533 = vperm.slane %v484, 0
  %v535 = vadd.f32 %v533, %v521
  %v536 = vadd.f32 %v533, %v524
  %v537 = vadd.f32 %v533, %v527
  %v538 = vadd.f32 %v533, %v530
  %s539 = scalar_lea.vmem %s5, 4
  %v540 = vld [vmem:[%s539] sm:$0xf]
  %v542 = vsel %vm486, %v449, 0
  %v545 = vsel %vm486, %v452, 0
  %v548 = vsel %vm486, %v455, 0
  %v551 = vsel %vm486, %v458, 0
  %v554 = vsel %vm499, %v540, 0
  %556 = vmatpush.msra.mxu0 0.0
  %557 = vmatpush.msra.mxu0 0.0
  %558 = vmatpush.msra.mxu0 0.0
  %559 = vmatpush.msra.mxu0 0.0
  %560 = vmatpush.msra.mxu0 0.0
  %561 = vmatpush.msra.mxu0 0.0
  %562 = vmatpush.msra.mxu0 0.0
  %563 = vmatpush.msra.mxu0 0.0
  %564 = vmatpush.msra.mxu0 0.0
  %565 = vmatpush.msra.mxu0 0.0
  %566 = vmatpush.msra.mxu0 0.0
  %567 = vmatpush.msra.mxu0 0.0
  %568 = vmatpush.msra.mxu0 0.0
  %569 = vmatpush.msra.mxu0 0.0
  %570 = vmatpush.msra.mxu0 0.0
  %571 = vmatpush.msra.mxu0 %v554
  %572 = vmatmul.f32.gmra.mxu0 %v542
  %v573 = vpop.f32.mrf.mxu0
  %v574 = vadd.f32 0.0, %v573
  %575 = vmatmul.f32.gmra.mxu0 %v545
  %v576 = vpop.f32.mrf.mxu0
  %v577 = vadd.f32 0.0, %v576
  %578 = vmatmul.f32.gmra.mxu0 %v548
  %v579 = vpop.f32.mrf.mxu0
  %v580 = vadd.f32 0.0, %v579
  %581 = vmatmul.f32.gmra.mxu0 %v551
  %v582 = vpop.f32.mrf.mxu0
  %v583 = vadd.f32 0.0, %v582
  %584 = vdwg.mxu0
  %v585 = vadd.f32 %v535, %v574
  %v586 = vadd.f32 %v536, %v577
  %v587 = vadd.f32 %v537, %v580
  %v588 = vadd.f32 %v538, %v583
  %s589 = scalar_lea.vmem %s5, 8
  %v590 = vld [vmem:[%s589] sm:$0xf]
  %v592 = vsel %vm486, %v461, 0
  %v595 = vsel %vm486, %v464, 0
  %v598 = vsel %vm486, %v467, 0
  %v601 = vsel %vm486, %v470, 0
  %v604 = vsel %vm499, %v590, 0
  %606 = vmatpush.msra.mxu0 0.0
  %607 = vmatpush.msra.mxu0 0.0
  %608 = vmatpush.msra.mxu0 0.0
  %609 = vmatpush.msra.mxu0 0.0
  %610 = vmatpush.msra.mxu0 0.0
  %611 = vmatpush.msra.mxu0 0.0
  %612 = vmatpush.msra.mxu0 0.0
  %613 = vmatpush.msra.mxu0 0.0
  %614 = vmatpush.msra.mxu0 0.0
  %615 = vmatpush.msra.mxu0 0.0
  %616 = vmatpush.msra.mxu0 0.0
  %617 = vmatpush.msra.mxu0 0.0
  %618 = vmatpush.msra.mxu0 0.0
  %619 = vmatpush.msra.mxu0 0.0
  %620 = vmatpush.msra.mxu0 0.0
  %621 = vmatpush.msra.mxu0 %v604
  %622 = vmatmul.f32.gmra.mxu0 %v592
  %v623 = vpop.f32.mrf.mxu0
  %v624 = vadd.f32 0.0, %v623
  %625 = vmatmul.f32.gmra.mxu0 %v595
  %v626 = vpop.f32.mrf.mxu0
  %v627 = vadd.f32 0.0, %v626
  %628 = vmatmul.f32.gmra.mxu0 %v598
  %v629 = vpop.f32.mrf.mxu0
  %v630 = vadd.f32 0.0, %v629
  %631 = vmatmul.f32.gmra.mxu0 %v601
  %v632 = vpop.f32.mrf.mxu0
  %v633 = vadd.f32 0.0, %v632
  %634 = vdwg.mxu0
  %v635 = vadd.f32 %v585, %v624
  %v636 = vadd.f32 %v586, %v627
  %v637 = vadd.f32 %v587, %v630
  %v638 = vadd.f32 %v588, %v633
  %s639 = scalar_lea.vmem %s5, 12
  %v640 = vld [vmem:[%s639] sm:$0xf]
  %v642 = vsel %vm486, %v473, 0
  %v645 = vsel %vm486, %v476, 0
  %v648 = vsel %vm486, %v479, 0
  %v651 = vsel %vm486, %v482, 0
  %v654 = vsel %vm499, %v640, 0
  %656 = vmatpush.msra.mxu0 0.0
  %657 = vmatpush.msra.mxu0 0.0
  %658 = vmatpush.msra.mxu0 0.0
  %659 = vmatpush.msra.mxu0 0.0
  %660 = vmatpush.msra.mxu0 0.0
  %661 = vmatpush.msra.mxu0 0.0
  %662 = vmatpush.msra.mxu0 0.0
  %663 = vmatpush.msra.mxu0 0.0
  %664 = vmatpush.msra.mxu0 0.0
  %665 = vmatpush.msra.mxu0 0.0
  %666 = vmatpush.msra.mxu0 0.0
  %667 = vmatpush.msra.mxu0 0.0
  %668 = vmatpush.msra.mxu0 0.0
  %669 = vmatpush.msra.mxu0 0.0
  %670 = vmatpush.msra.mxu0 0.0
  %671 = vmatpush.msra.mxu0 %v654
  %672 = vmatmul.f32.gmra.mxu0 %v642
  %v673 = vpop.f32.mrf.mxu0
  %v674 = vadd.f32 0.0, %v673
  %675 = vmatmul.f32.gmra.mxu0 %v645
  %v676 = vpop.f32.mrf.mxu0
  %v677 = vadd.f32 0.0, %v676
  %678 = vmatmul.f32.gmra.mxu0 %v648
  %v679 = vpop.f32.mrf.mxu0
  %v680 = vadd.f32 0.0, %v679
  %681 = vmatmul.f32.gmra.mxu0 %v651
  %v682 = vpop.f32.mrf.mxu0
  %v683 = vadd.f32 0.0, %v682
  %684 = vdwg.mxu0
  %v685 = vadd.f32 %v635, %v674
  %v686 = vadd.f32 %v636, %v677
  %v687 = vadd.f32 %v637, %v680
  %v688 = vadd.f32 %v638, %v683
  %v689 = vmax.f32 %v685, %v686
  %v690 = vmax.f32 %v687, %v688
  %v691 = vmax.f32 %v689, %v690
  %v692 = vmax.f32 %v691, 0.0
  %v693 = vld [vmem:[%s7] sm:$0x3]
  %vm694 = vcmask 64512
  %v696 = vsel %vm694, %v693, 0
  %698 = vmatpush.msra.mxu0 0.0
  %699 = vmatpush.msra.mxu0 0.0
  %700 = vmatpush.msra.mxu0 0.0
  %701 = vmatpush.msra.mxu0 0.0
  %702 = vmatpush.msra.mxu0 0.0
  %703 = vmatpush.msra.mxu0 0.0
  %704 = vmatpush.msra.mxu0 0.0
  %705 = vmatpush.msra.mxu0 0.0
  %706 = vmatpush.msra.mxu0 0.0
  %707 = vmatpush.msra.mxu0 0.0
  %708 = vmatpush.msra.mxu0 0.0
  %709 = vmatpush.msra.mxu0 0.0
  %710 = vmatpush.msra.mxu0 0.0
  %711 = vmatpush.msra.mxu0 0.0
  %712 = vmatpush.msra.mxu0 0.0
  %713 = vmatpush.msra.mxu0 %v692
  %714 = vmatmul.f32.gmra.mxu0 %v696
  %v715 = vpop.f32.mrf.mxu0
  %v716 = vadd.f32 0.0, %v715
  %717 = vdwg.mxu0
  %v718 = vld [vmem:[%s8] sm:$0xff]
  %v719 = vld [vmem:[%s8 + $0x8] sm:$0xff]
  %v720 = vld [vmem:[%s8 + $0x10] sm:$0xff]
  %v721 = vld [vmem:[%s8 + $0x18] sm:$0xf]
  %s722 = scalar_lea.vmem %s7, 2
  %v723 = vld [vmem:[%s722] sm:$0x3]
  %v725 = vsel %vm694, %v723, 0
  %727 = vmatpush.msra.mxu0 0.0
  %728 = vmatpush.msra.mxu0 0.0
  %729 = vmatpush.msra.mxu0 0.0
  %730 = vmatpush.msra.mxu0 0.0
  %731 = vmatpush.msra.mxu0 0.0
  %732 = vmatpush.msra.mxu0 0.0
  %733 = vmatpush.msra.mxu0 0.0
  %734 = vmatpush.msra.mxu0 0.0
  %735 = vmatpush.msra.mxu0 0.0
  %736 = vmatpush.msra.mxu0 0.0
  %737 = vmatpush.msra.mxu0 0.0
  %738 = vmatpush.msra.mxu0 0.0
  %739 = vmatpush.msra.mxu0 0.0
  %740 = vmatpush.msra.mxu0 0.0
  %741 = vmatpush.msra.mxu0 0.0
  %742 = vmatpush.msra.mxu0 %v692
  %743 = vmatmul.f32.gmra.mxu0 %v725
  %v744 = vpop.f32.mrf.mxu0
  %v745 = vadd.f32 0.0, %v744
  %746 = vdwg.mxu0
  %s747 = scalar_lea.vmem %s8, 28
  %v748 = vld [vmem:[%s747] sm:$0xff]
  %v749 = vld [vmem:[%s747 + $0x8] sm:$0xff]
  %v750 = vld [vmem:[%s747 + $0x10] sm:$0xff]
  %v751 = vld [vmem:[%s747 + $0x18] sm:$0xf]
  %756 = vst [vmem:[#allocation1] ss:$2 sm:$0xff] %v748
  %s757 = scalar_lea.vmem [#allocation1], 16
  %758 = vst [vmem:[%s757] ss:$2 sm:$0xff] %v749
  %s759 = scalar_lea.vmem [#allocation1], 32
  %760 = vst [vmem:[%s759] ss:$2 sm:$0xff] %v750
  %s761 = scalar_lea.vmem [#allocation1], 48
  %762 = vst [vmem:[%s761] ss:$2 sm:$0xff] %v751
  %v763 = vld.sshfl [vmem:[#allocation1] sm:$0xff pattern:$0x75316420]
  %v764 = vld.sshfl [vmem:[#allocation1 + $0x8] sm:$0xff pattern:$0x75316420]
  %v765 = vld.sshfl [vmem:[#allocation1 + $0x10] sm:$0xff pattern:$0x75316420]
  %v766 = vld.sshfl [vmem:[#allocation1 + $0x18] sm:$0xff pattern:$0x75316420]
  %v767 = vld.sshfl [vmem:[#allocation1 + $0x20] sm:$0xff pattern:$0x75316420]
  %v768 = vld.sshfl [vmem:[#allocation1 + $0x28] sm:$0xff pattern:$0x75316420]
  %v769 = vld.sshfl [vmem:[#allocation1 + $0x30] sm:$0xff pattern:$0x75316420]
  %v771 = vsel %vm486, %v745, 0
  %v773 = vsel %vm499, %v763, 0
  %v775 = vsel %vm499, %v764, 0
  %v777 = vsel %vm499, %v765, 0
  %v779 = vsel %vm499, %v766, 0
  %v781 = vsel %vm499, %v767, 0
  %v783 = vsel %vm499, %v768, 0
  %v785 = vsel %vm499, %v769, 0
  %787 = vmatpush.msra.mxu0 0.0
  %788 = vmatpush.msra.mxu0 0.0
  %789 = vmatpush.msra.mxu0 0.0
  %790 = vmatpush.msra.mxu0 0.0
  %791 = vmatpush.msra.mxu0 0.0
  %792 = vmatpush.msra.mxu0 0.0
  %793 = vmatpush.msra.mxu0 0.0
  %794 = vmatpush.msra.mxu0 0.0
  %795 = vmatpush.msra.mxu0 0.0
  %796 = vmatpush.msra.mxu0 0.0
  %797 = vmatpush.msra.mxu0 0.0
  %798 = vmatpush.msra.mxu0 0.0
  %799 = vmatpush.msra.mxu0 0.0
  %800 = vmatpush.msra.mxu0 0.0
  %801 = vmatpush.msra.mxu0 0.0
  %802 = vmatpush.msra.mxu0 %v773
  %803 = vmatmul.f32.gmra.mxu0 %v771
  %v804 = vpop.f32.mrf.mxu0
  %v805 = vadd.f32 0.0, %v804
  %806 = vdwg.mxu0
  %807 = vmatpush.msra.mxu0 0.0
  %808 = vmatpush.msra.mxu0 0.0
  %809 = vmatpush.msra.mxu0 0.0
  %810 = vmatpush.msra.mxu0 0.0
  %811 = vmatpush.msra.mxu0 0.0
  %812 = vmatpush.msra.mxu0 0.0
  %813 = vmatpush.msra.mxu0 0.0
  %814 = vmatpush.msra.mxu0 0.0
  %815 = vmatpush.msra.mxu0 0.0
  %816 = vmatpush.msra.mxu0 0.0
  %817 = vmatpush.msra.mxu0 0.0
  %818 = vmatpush.msra.mxu0 0.0
  %819 = vmatpush.msra.mxu0 0.0
  %820 = vmatpush.msra.mxu0 0.0
  %821 = vmatpush.msra.mxu0 0.0
  %822 = vmatpush.msra.mxu0 %v775
  %823 = vmatmul.f32.gmra.mxu0 %v771
  %v824 = vpop.f32.mrf.mxu0
  %v825 = vadd.f32 0.0, %v824
  %826 = vdwg.mxu0
  %827 = vmatpush.msra.mxu0 0.0
  %828 = vmatpush.msra.mxu0 0.0
  %829 = vmatpush.msra.mxu0 0.0
  %830 = vmatpush.msra.mxu0 0.0
  %831 = vmatpush.msra.mxu0 0.0
  %832 = vmatpush.msra.mxu0 0.0
  %833 = vmatpush.msra.mxu0 0.0
  %834 = vmatpush.msra.mxu0 0.0
  %835 = vmatpush.msra.mxu0 0.0
  %836 = vmatpush.msra.mxu0 0.0
  %837 = vmatpush.msra.mxu0 0.0
  %838 = vmatpush.msra.mxu0 0.0
  %839 = vmatpush.msra.mxu0 0.0
  %840 = vmatpush.msra.mxu0 0.0
  %841 = vmatpush.msra.mxu0 0.0
  %842 = vmatpush.msra.mxu0 %v777
  %843 = vmatmul.f32.gmra.mxu0 %v771
  %v844 = vpop.f32.mrf.mxu0
  %v845 = vadd.f32 0.0, %v844
  %846 = vdwg.mxu0
  %847 = vmatpush.msra.mxu0 0.0
  %848 = vmatpush.msra.mxu0 0.0
  %849 = vmatpush.msra.mxu0 0.0
  %850 = vmatpush.msra.mxu0 0.0
  %851 = vmatpush.msra.mxu0 0.0
  %852 = vmatpush.msra.mxu0 0.0
  %853 = vmatpush.msra.mxu0 0.0
  %854 = vmatpush.msra.mxu0 0.0
  %855 = vmatpush.msra.mxu0 0.0
  %856 = vmatpush.msra.mxu0 0.0
  %857 = vmatpush.msra.mxu0 0.0
  %858 = vmatpush.msra.mxu0 0.0
  %859 = vmatpush.msra.mxu0 0.0
  %860 = vmatpush.msra.mxu0 0.0
  %861 = vmatpush.msra.mxu0 0.0
  %862 = vmatpush.msra.mxu0 %v779
  %863 = vmatmul.f32.gmra.mxu0 %v771
  %v864 = vpop.f32.mrf.mxu0
  %v865 = vadd.f32 0.0, %v864
  %866 = vdwg.mxu0
  %867 = vmatpush.msra.mxu0 0.0
  %868 = vmatpush.msra.mxu0 0.0
  %869 = vmatpush.msra.mxu0 0.0
  %870 = vmatpush.msra.mxu0 0.0
  %871 = vmatpush.msra.mxu0 0.0
  %872 = vmatpush.msra.mxu0 0.0
  %873 = vmatpush.msra.mxu0 0.0
  %874 = vmatpush.msra.mxu0 0.0
  %875 = vmatpush.msra.mxu0 0.0
  %876 = vmatpush.msra.mxu0 0.0
  %877 = vmatpush.msra.mxu0 0.0
  %878 = vmatpush.msra.mxu0 0.0
  %879 = vmatpush.msra.mxu0 0.0
  %880 = vmatpush.msra.mxu0 0.0
  %881 = vmatpush.msra.mxu0 0.0
  %882 = vmatpush.msra.mxu0 %v781
  %883 = vmatmul.f32.gmra.mxu0 %v771
  %v884 = vpop.f32.mrf.mxu0
  %v885 = vadd.f32 0.0, %v884
  %886 = vdwg.mxu0
  %887 = vmatpush.msra.mxu0 0.0
  %888 = vmatpush.msra.mxu0 0.0
  %889 = vmatpush.msra.mxu0 0.0
  %890 = vmatpush.msra.mxu0 0.0
  %891 = vmatpush.msra.mxu0 0.0
  %892 = vmatpush.msra.mxu0 0.0
  %893 = vmatpush.msra.mxu0 0.0
  %894 = vmatpush.msra.mxu0 0.0
  %895 = vmatpush.msra.mxu0 0.0
  %896 = vmatpush.msra.mxu0 0.0
  %897 = vmatpush.msra.mxu0 0.0
  %898 = vmatpush.msra.mxu0 0.0
  %899 = vmatpush.msra.mxu0 0.0
  %900 = vmatpush.msra.mxu0 0.0
  %901 = vmatpush.msra.mxu0 0.0
  %902 = vmatpush.msra.mxu0 %v783
  %903 = vmatmul.f32.gmra.mxu0 %v771
  %v904 = vpop.f32.mrf.mxu0
  %v905 = vadd.f32 0.0, %v904
  %906 = vdwg.mxu0
  %907 = vmatpush.msra.mxu0 0.0
  %908 = vmatpush.msra.mxu0 0.0
  %909 = vmatpush.msra.mxu0 0.0
  %910 = vmatpush.msra.mxu0 0.0
  %911 = vmatpush.msra.mxu0 0.0
  %912 = vmatpush.msra.mxu0 0.0
  %913 = vmatpush.msra.mxu0 0.0
  %914 = vmatpush.msra.mxu0 0.0
  %915 = vmatpush.msra.mxu0 0.0
  %916 = vmatpush.msra.mxu0 0.0
  %917 = vmatpush.msra.mxu0 0.0
  %918 = vmatpush.msra.mxu0 0.0
  %919 = vmatpush.msra.mxu0 0.0
  %920 = vmatpush.msra.mxu0 0.0
  %921 = vmatpush.msra.mxu0 0.0
  %922 = vmatpush.msra.mxu0 %v785
  %923 = vmatmul.f32.gmra.mxu0 %v771
  %v924 = vpop.f32.mrf.mxu0
  %v925 = vadd.f32 0.0, %v924
  %926 = vdwg.mxu0
  %931 = vst [vmem:[#allocation1] ss:$2 sm:$0xff] %v718
  %s932 = scalar_lea.vmem [#allocation1], 16
  %933 = vst [vmem:[%s932] ss:$2 sm:$0xff] %v719
  %s934 = scalar_lea.vmem [#allocation1], 32
  %935 = vst [vmem:[%s934] ss:$2 sm:$0xff] %v720
  %s936 = scalar_lea.vmem [#allocation1], 48
  %937 = vst [vmem:[%s936] ss:$2 sm:$0xff] %v721
  %v938 = vld.sshfl [vmem:[#allocation1] sm:$0xff pattern:$0x75316420]
  %v939 = vld.sshfl [vmem:[#allocation1 + $0x8] sm:$0xff pattern:$0x75316420]
  %v940 = vld.sshfl [vmem:[#allocation1 + $0x10] sm:$0xff pattern:$0x75316420]
  %v941 = vld.sshfl [vmem:[#allocation1 + $0x18] sm:$0xff pattern:$0x75316420]
  %v942 = vld.sshfl [vmem:[#allocation1 + $0x20] sm:$0xff pattern:$0x75316420]
  %v943 = vld.sshfl [vmem:[#allocation1 + $0x28] sm:$0xff pattern:$0x75316420]
  %v944 = vld.sshfl [vmem:[#allocation1 + $0x30] sm:$0xff pattern:$0x75316420]
  %v946 = vsel %vm486, %v716, 0
  %v948 = vsel %vm499, %v938, 0
  %v950 = vsel %vm499, %v939, 0
  %v952 = vsel %vm499, %v940, 0
  %v954 = vsel %vm499, %v941, 0
  %v956 = vsel %vm499, %v942, 0
  %v958 = vsel %vm499, %v943, 0
  %v960 = vsel %vm499, %v944, 0
  %962 = vmatpush.msra.mxu0 0.0
  %963 = vmatpush.msra.mxu0 0.0
  %964 = vmatpush.msra.mxu0 0.0
  %965 = vmatpush.msra.mxu0 0.0
  %966 = vmatpush.msra.mxu0 0.0
  %967 = vmatpush.msra.mxu0 0.0
  %968 = vmatpush.msra.mxu0 0.0
  %969 = vmatpush.msra.mxu0 0.0
  %970 = vmatpush.msra.mxu0 0.0
  %971 = vmatpush.msra.mxu0 0.0
  %972 = vmatpush.msra.mxu0 0.0
  %973 = vmatpush.msra.mxu0 0.0
  %974 = vmatpush.msra.mxu0 0.0
  %975 = vmatpush.msra.mxu0 0.0
  %976 = vmatpush.msra.mxu0 0.0
  %977 = vmatpush.msra.mxu0 %v948
  %978 = vmatmul.f32.gmra.mxu0 %v946
  %v979 = vpop.f32.mrf.mxu0
  %v980 = vadd.f32 %v805, %v979
  %981 = vdwg.mxu0
  %982 = vmatpush.msra.mxu0 0.0
  %983 = vmatpush.msra.mxu0 0.0
  %984 = vmatpush.msra.mxu0 0.0
  %985 = vmatpush.msra.mxu0 0.0
  %986 = vmatpush.msra.mxu0 0.0
  %987 = vmatpush.msra.mxu0 0.0
  %988 = vmatpush.msra.mxu0 0.0
  %989 = vmatpush.msra.mxu0 0.0
  %990 = vmatpush.msra.mxu0 0.0
  %991 = vmatpush.msra.mxu0 0.0
  %992 = vmatpush.msra.mxu0 0.0
  %993 = vmatpush.msra.mxu0 0.0
  %994 = vmatpush.msra.mxu0 0.0
  %995 = vmatpush.msra.mxu0 0.0
  %996 = vmatpush.msra.mxu0 0.0
  %997 = vmatpush.msra.mxu0 %v950
  %998 = vmatmul.f32.gmra.mxu0 %v946
  %v999 = vpop.f32.mrf.mxu0
  %v1000 = vadd.f32 %v825, %v999
  %1001 = vdwg.mxu0
  %1002 = vmatpush.msra.mxu0 0.0
  %1003 = vmatpush.msra.mxu0 0.0
  %1004 = vmatpush.msra.mxu0 0.0
  %1005 = vmatpush.msra.mxu0 0.0
  %1006 = vmatpush.msra.mxu0 0.0
  %1007 = vmatpush.msra.mxu0 0.0
  %1008 = vmatpush.msra.mxu0 0.0
  %1009 = vmatpush.msra.mxu0 0.0
  %1010 = vmatpush.msra.mxu0 0.0
  %1011 = vmatpush.msra.mxu0 0.0
  %1012 = vmatpush.msra.mxu0 0.0
  %1013 = vmatpush.msra.mxu0 0.0
  %1014 = vmatpush.msra.mxu0 0.0
  %1015 = vmatpush.msra.mxu0 0.0
  %1016 = vmatpush.msra.mxu0 0.0
  %1017 = vmatpush.msra.mxu0 %v952
  %1018 = vmatmul.f32.gmra.mxu0 %v946
  %v1019 = vpop.f32.mrf.mxu0
  %v1020 = vadd.f32 %v845, %v1019
  %1021 = vdwg.mxu0
  %1022 = vmatpush.msra.mxu0 0.0
  %1023 = vmatpush.msra.mxu0 0.0
  %1024 = vmatpush.msra.mxu0 0.0
  %1025 = vmatpush.msra.mxu0 0.0
  %1026 = vmatpush.msra.mxu0 0.0
  %1027 = vmatpush.msra.mxu0 0.0
  %1028 = vmatpush.msra.mxu0 0.0
  %1029 = vmatpush.msra.mxu0 0.0
  %1030 = vmatpush.msra.mxu0 0.0
  %1031 = vmatpush.msra.mxu0 0.0
  %1032 = vmatpush.msra.mxu0 0.0
  %1033 = vmatpush.msra.mxu0 0.0
  %1034 = vmatpush.msra.mxu0 0.0
  %1035 = vmatpush.msra.mxu0 0.0
  %1036 = vmatpush.msra.mxu0 0.0
  %1037 = vmatpush.msra.mxu0 %v954
  %1038 = vmatmul.f32.gmra.mxu0 %v946
  %v1039 = vpop.f32.mrf.mxu0
  %v1040 = vadd.f32 %v865, %v1039
  %1041 = vdwg.mxu0
  %1042 = vmatpush.msra.mxu0 0.0
  %1043 = vmatpush.msra.mxu0 0.0
  %1044 = vmatpush.msra.mxu0 0.0
  %1045 = vmatpush.msra.mxu0 0.0
  %1046 = vmatpush.msra.mxu0 0.0
  %1047 = vmatpush.msra.mxu0 0.0
  %1048 = vmatpush.msra.mxu0 0.0
  %1049 = vmatpush.msra.mxu0 0.0
  %1050 = vmatpush.msra.mxu0 0.0
  %1051 = vmatpush.msra.mxu0 0.0
  %1052 = vmatpush.msra.mxu0 0.0
  %1053 = vmatpush.msra.mxu0 0.0
  %1054 = vmatpush.msra.mxu0 0.0
  %1055 = vmatpush.msra.mxu0 0.0
  %1056 = vmatpush.msra.mxu0 0.0
  %1057 = vmatpush.msra.mxu0 %v956
  %1058 = vmatmul.f32.gmra.mxu0 %v946
  %v1059 = vpop.f32.mrf.mxu0
  %v1060 = vadd.f32 %v885, %v1059
  %1061 = vdwg.mxu0
  %1062 = vmatpush.msra.mxu0 0.0
  %1063 = vmatpush.msra.mxu0 0.0
  %1064 = vmatpush.msra.mxu0 0.0
  %1065 = vmatpush.msra.mxu0 0.0
  %1066 = vmatpush.msra.mxu0 0.0
  %1067 = vmatpush.msra.mxu0 0.0
  %1068 = vmatpush.msra.mxu0 0.0
  %1069 = vmatpush.msra.mxu0 0.0
  %1070 = vmatpush.msra.mxu0 0.0
  %1071 = vmatpush.msra.mxu0 0.0
  %1072 = vmatpush.msra.mxu0 0.0
  %1073 = vmatpush.msra.mxu0 0.0
  %1074 = vmatpush.msra.mxu0 0.0
  %1075 = vmatpush.msra.mxu0 0.0
  %1076 = vmatpush.msra.mxu0 0.0
  %1077 = vmatpush.msra.mxu0 %v958
  %1078 = vmatmul.f32.gmra.mxu0 %v946
  %v1079 = vpop.f32.mrf.mxu0
  %v1080 = vadd.f32 %v905, %v1079
  %1081 = vdwg.mxu0
  %1082 = vmatpush.msra.mxu0 0.0
  %1083 = vmatpush.msra.mxu0 0.0
  %1084 = vmatpush.msra.mxu0 0.0
  %1085 = vmatpush.msra.mxu0 0.0
  %1086 = vmatpush.msra.mxu0 0.0
  %1087 = vmatpush.msra.mxu0 0.0
  %1088 = vmatpush.msra.mxu0 0.0
  %1089 = vmatpush.msra.mxu0 0.0
  %1090 = vmatpush.msra.mxu0 0.0
  %1091 = vmatpush.msra.mxu0 0.0
  %1092 = vmatpush.msra.mxu0 0.0
  %1093 = vmatpush.msra.mxu0 0.0
  %1094 = vmatpush.msra.mxu0 0.0
  %1095 = vmatpush.msra.mxu0 0.0
  %1096 = vmatpush.msra.mxu0 0.0
  %1097 = vmatpush.msra.mxu0 %v960
  %1098 = vmatmul.f32.gmra.mxu0 %v946
  %v1099 = vpop.f32.mrf.mxu0
  %v1100 = vadd.f32 %v925, %v1099
  %1101 = vdwg.mxu0
  %s1102 = scalar_lea.vmem %s7, 4
  %v1103 = vld [vmem:[%s1102] sm:$0x3]
  %v1105 = vsel %vm694, %v1103, 0
  %1107 = vmatpush.msra.mxu0 0.0
  %1108 = vmatpush.msra.mxu0 0.0
  %1109 = vmatpush.msra.mxu0 0.0
  %1110 = vmatpush.msra.mxu0 0.0
  %1111 = vmatpush.msra.mxu0 0.0
  %1112 = vmatpush.msra.mxu0 0.0
  %1113 = vmatpush.msra.mxu0 0.0
  %1114 = vmatpush.msra.mxu0 0.0
  %1115 = vmatpush.msra.mxu0 0.0
  %1116 = vmatpush.msra.mxu0 0.0
  %1117 = vmatpush.msra.mxu0 0.0
  %1118 = vmatpush.msra.mxu0 0.0
  %1119 = vmatpush.msra.mxu0 0.0
  %1120 = vmatpush.msra.mxu0 0.0
  %1121 = vmatpush.msra.mxu0 0.0
  %1122 = vmatpush.msra.mxu0 %v692
  %1123 = vmatmul.f32.gmra.mxu0 %v1105
  %v1124 = vpop.f32.mrf.mxu0
  %v1125 = vadd.f32 0.0, %v1124
  %1126 = vdwg.mxu0
  %s1127 = scalar_lea.vmem %s8, 56
  %v1128 = vld [vmem:[%s1127] sm:$0xff]
  %v1129 = vld [vmem:[%s1127 + $0x8] sm:$0xff]
  %v1130 = vld [vmem:[%s1127 + $0x10] sm:$0xff]
  %v1131 = vld [vmem:[%s1127 + $0x18] sm:$0xf]
  %1136 = vst [vmem:[#allocation1] ss:$2 sm:$0xff] %v1128
  %s1137 = scalar_lea.vmem [#allocation1], 16
  %1138 = vst [vmem:[%s1137] ss:$2 sm:$0xff] %v1129
  %s1139 = scalar_lea.vmem [#allocation1], 32
  %1140 = vst [vmem:[%s1139] ss:$2 sm:$0xff] %v1130
  %s1141 = scalar_lea.vmem [#allocation1], 48
  %1142 = vst [vmem:[%s1141] ss:$2 sm:$0xff] %v1131
  %v1143 = vld.sshfl [vmem:[#allocation1] sm:$0xff pattern:$0x75316420]
  %v1144 = vld.sshfl [vmem:[#allocation1 + $0x8] sm:$0xff pattern:$0x75316420]
  %v1145 = vld.sshfl [vmem:[#allocation1 + $0x10] sm:$0xff pattern:$0x75316420]
  %v1146 = vld.sshfl [vmem:[#allocation1 + $0x18] sm:$0xff pattern:$0x75316420]
  %v1147 = vld.sshfl [vmem:[#allocation1 + $0x20] sm:$0xff pattern:$0x75316420]
  %v1148 = vld.sshfl [vmem:[#allocation1 + $0x28] sm:$0xff pattern:$0x75316420]
  %v1149 = vld.sshfl [vmem:[#allocation1 + $0x30] sm:$0xff pattern:$0x75316420]
  %v1151 = vsel %vm486, %v1125, 0
  %v1153 = vsel %vm499, %v1143, 0
  %v1155 = vsel %vm499, %v1144, 0
  %v1157 = vsel %vm499, %v1145, 0
  %v1159 = vsel %vm499, %v1146, 0
  %v1161 = vsel %vm499, %v1147, 0
  %v1163 = vsel %vm499, %v1148, 0
  %v1165 = vsel %vm499, %v1149, 0
  %1167 = vmatpush.msra.mxu0 0.0
  %1168 = vmatpush.msra.mxu0 0.0
  %1169 = vmatpush.msra.mxu0 0.0
  %1170 = vmatpush.msra.mxu0 0.0
  %1171 = vmatpush.msra.mxu0 0.0
  %1172 = vmatpush.msra.mxu0 0.0
  %1173 = vmatpush.msra.mxu0 0.0
  %1174 = vmatpush.msra.mxu0 0.0
  %1175 = vmatpush.msra.mxu0 0.0
  %1176 = vmatpush.msra.mxu0 0.0
  %1177 = vmatpush.msra.mxu0 0.0
  %1178 = vmatpush.msra.mxu0 0.0
  %1179 = vmatpush.msra.mxu0 0.0
  %1180 = vmatpush.msra.mxu0 0.0
  %1181 = vmatpush.msra.mxu0 0.0
  %1182 = vmatpush.msra.mxu0 %v1153
  %1183 = vmatmul.f32.gmra.mxu0 %v1151
  %v1184 = vpop.f32.mrf.mxu0
  %v1185 = vadd.f32 0.0, %v1184
  %1186 = vdwg.mxu0
  %1187 = vmatpush.msra.mxu0 0.0
  %1188 = vmatpush.msra.mxu0 0.0
  %1189 = vmatpush.msra.mxu0 0.0
  %1190 = vmatpush.msra.mxu0 0.0
  %1191 = vmatpush.msra.mxu0 0.0
  %1192 = vmatpush.msra.mxu0 0.0
  %1193 = vmatpush.msra.mxu0 0.0
  %1194 = vmatpush.msra.mxu0 0.0
  %1195 = vmatpush.msra.mxu0 0.0
  %1196 = vmatpush.msra.mxu0 0.0
  %1197 = vmatpush.msra.mxu0 0.0
  %1198 = vmatpush.msra.mxu0 0.0
  %1199 = vmatpush.msra.mxu0 0.0
  %1200 = vmatpush.msra.mxu0 0.0
  %1201 = vmatpush.msra.mxu0 0.0
  %1202 = vmatpush.msra.mxu0 %v1155
  %1203 = vmatmul.f32.gmra.mxu0 %v1151
  %v1204 = vpop.f32.mrf.mxu0
  %v1205 = vadd.f32 0.0, %v1204
  %1206 = vdwg.mxu0
  %1207 = vmatpush.msra.mxu0 0.0
  %1208 = vmatpush.msra.mxu0 0.0
  %1209 = vmatpush.msra.mxu0 0.0
  %1210 = vmatpush.msra.mxu0 0.0
  %1211 = vmatpush.msra.mxu0 0.0
  %1212 = vmatpush.msra.mxu0 0.0
  %1213 = vmatpush.msra.mxu0 0.0
  %1214 = vmatpush.msra.mxu0 0.0
  %1215 = vmatpush.msra.mxu0 0.0
  %1216 = vmatpush.msra.mxu0 0.0
  %1217 = vmatpush.msra.mxu0 0.0
  %1218 = vmatpush.msra.mxu0 0.0
  %1219 = vmatpush.msra.mxu0 0.0
  %1220 = vmatpush.msra.mxu0 0.0
  %1221 = vmatpush.msra.mxu0 0.0
  %1222 = vmatpush.msra.mxu0 %v1157
  %1223 = vmatmul.f32.gmra.mxu0 %v1151
  %v1224 = vpop.f32.mrf.mxu0
  %v1225 = vadd.f32 0.0, %v1224
  %1226 = vdwg.mxu0
  %1227 = vmatpush.msra.mxu0 0.0
  %1228 = vmatpush.msra.mxu0 0.0
  %1229 = vmatpush.msra.mxu0 0.0
  %1230 = vmatpush.msra.mxu0 0.0
  %1231 = vmatpush.msra.mxu0 0.0
  %1232 = vmatpush.msra.mxu0 0.0
  %1233 = vmatpush.msra.mxu0 0.0
  %1234 = vmatpush.msra.mxu0 0.0
  %1235 = vmatpush.msra.mxu0 0.0
  %1236 = vmatpush.msra.mxu0 0.0
  %1237 = vmatpush.msra.mxu0 0.0
  %1238 = vmatpush.msra.mxu0 0.0
  %1239 = vmatpush.msra.mxu0 0.0
  %1240 = vmatpush.msra.mxu0 0.0
  %1241 = vmatpush.msra.mxu0 0.0
  %1242 = vmatpush.msra.mxu0 %v1159
  %1243 = vmatmul.f32.gmra.mxu0 %v1151
  %v1244 = vpop.f32.mrf.mxu0
  %v1245 = vadd.f32 0.0, %v1244
  %1246 = vdwg.mxu0
  %1247 = vmatpush.msra.mxu0 0.0
  %1248 = vmatpush.msra.mxu0 0.0
  %1249 = vmatpush.msra.mxu0 0.0
  %1250 = vmatpush.msra.mxu0 0.0
  %1251 = vmatpush.msra.mxu0 0.0
  %1252 = vmatpush.msra.mxu0 0.0
  %1253 = vmatpush.msra.mxu0 0.0
  %1254 = vmatpush.msra.mxu0 0.0
  %1255 = vmatpush.msra.mxu0 0.0
  %1256 = vmatpush.msra.mxu0 0.0
  %1257 = vmatpush.msra.mxu0 0.0
  %1258 = vmatpush.msra.mxu0 0.0
  %1259 = vmatpush.msra.mxu0 0.0
  %1260 = vmatpush.msra.mxu0 0.0
  %1261 = vmatpush.msra.mxu0 0.0
  %1262 = vmatpush.msra.mxu0 %v1161
  %1263 = vmatmul.f32.gmra.mxu0 %v1151
  %v1264 = vpop.f32.mrf.mxu0
  %v1265 = vadd.f32 0.0, %v1264
  %1266 = vdwg.mxu0
  %1267 = vmatpush.msra.mxu0 0.0
  %1268 = vmatpush.msra.mxu0 0.0
  %1269 = vmatpush.msra.mxu0 0.0
  %1270 = vmatpush.msra.mxu0 0.0
  %1271 = vmatpush.msra.mxu0 0.0
  %1272 = vmatpush.msra.mxu0 0.0
  %1273 = vmatpush.msra.mxu0 0.0
  %1274 = vmatpush.msra.mxu0 0.0
  %1275 = vmatpush.msra.mxu0 0.0
  %1276 = vmatpush.msra.mxu0 0.0
  %1277 = vmatpush.msra.mxu0 0.0
  %1278 = vmatpush.msra.mxu0 0.0
  %1279 = vmatpush.msra.mxu0 0.0
  %1280 = vmatpush.msra.mxu0 0.0
  %1281 = vmatpush.msra.mxu0 0.0
  %1282 = vmatpush.msra.mxu0 %v1163
  %1283 = vmatmul.f32.gmra.mxu0 %v1151
  %v1284 = vpop.f32.mrf.mxu0
  %v1285 = vadd.f32 0.0, %v1284
  %1286 = vdwg.mxu0
  %1287 = vmatpush.msra.mxu0 0.0
  %1288 = vmatpush.msra.mxu0 0.0
  %1289 = vmatpush.msra.mxu0 0.0
  %1290 = vmatpush.msra.mxu0 0.0
  %1291 = vmatpush.msra.mxu0 0.0
  %1292 = vmatpush.msra.mxu0 0.0
  %1293 = vmatpush.msra.mxu0 0.0
  %1294 = vmatpush.msra.mxu0 0.0
  %1295 = vmatpush.msra.mxu0 0.0
  %1296 = vmatpush.msra.mxu0 0.0
  %1297 = vmatpush.msra.mxu0 0.0
  %1298 = vmatpush.msra.mxu0 0.0
  %1299 = vmatpush.msra.mxu0 0.0
  %1300 = vmatpush.msra.mxu0 0.0
  %1301 = vmatpush.msra.mxu0 0.0
  %1302 = vmatpush.msra.mxu0 %v1165
  %1303 = vmatmul.f32.gmra.mxu0 %v1151
  %v1304 = vpop.f32.mrf.mxu0
  %v1305 = vadd.f32 0.0, %v1304
  %1306 = vdwg.mxu0
  %v1307 = vadd.f32 %v980, %v1185
  %v1308 = vadd.f32 %v1000, %v1205
  %v1309 = vadd.f32 %v1020, %v1225
  %v1310 = vadd.f32 %v1040, %v1245
  %v1311 = vadd.f32 %v1060, %v1265
  %v1312 = vadd.f32 %v1080, %v1285
  %v1313 = vadd.f32 %v1100, %v1305
  %s1314 = scalar_lea.vmem %s7, 6
  %v1315 = vld [vmem:[%s1314] sm:$0x3]
  %v1317 = vsel %vm694, %v1315, 0
  %1319 = vmatpush.msra.mxu0 0.0
  %1320 = vmatpush.msra.mxu0 0.0
  %1321 = vmatpush.msra.mxu0 0.0
  %1322 = vmatpush.msra.mxu0 0.0
  %1323 = vmatpush.msra.mxu0 0.0
  %1324 = vmatpush.msra.mxu0 0.0
  %1325 = vmatpush.msra.mxu0 0.0
  %1326 = vmatpush.msra.mxu0 0.0
  %1327 = vmatpush.msra.mxu0 0.0
  %1328 = vmatpush.msra.mxu0 0.0
  %1329 = vmatpush.msra.mxu0 0.0
  %1330 = vmatpush.msra.mxu0 0.0
  %1331 = vmatpush.msra.mxu0 0.0
  %1332 = vmatpush.msra.mxu0 0.0
  %1333 = vmatpush.msra.mxu0 0.0
  %1334 = vmatpush.msra.mxu0 %v692
  %1335 = vmatmul.f32.gmra.mxu0 %v1317
  %v1336 = vpop.f32.mrf.mxu0
  %v1337 = vadd.f32 0.0, %v1336
  %1338 = vdwg.mxu0
  %s1339 = scalar_lea.vmem %s8, 84
  %v1340 = vld [vmem:[%s1339] sm:$0xff]
  %v1341 = vld [vmem:[%s1339 + $0x8] sm:$0xff]
  %v1342 = vld [vmem:[%s1339 + $0x10] sm:$0xff]
  %v1343 = vld [vmem:[%s1339 + $0x18] sm:$0xf]
  %1348 = vst [vmem:[#allocation1] ss:$2 sm:$0xff] %v1340
  %s1349 = scalar_lea.vmem [#allocation1], 16
  %1350 = vst [vmem:[%s1349] ss:$2 sm:$0xff] %v1341
  %s1351 = scalar_lea.vmem [#allocation1], 32
  %1352 = vst [vmem:[%s1351] ss:$2 sm:$0xff] %v1342
  %s1353 = scalar_lea.vmem [#allocation1], 48
  %1354 = vst [vmem:[%s1353] ss:$2 sm:$0xff] %v1343
  %v1355 = vld.sshfl [vmem:[#allocation1] sm:$0xff pattern:$0x75316420]
  %v1356 = vld.sshfl [vmem:[#allocation1 + $0x8] sm:$0xff pattern:$0x75316420]
  %v1357 = vld.sshfl [vmem:[#allocation1 + $0x10] sm:$0xff pattern:$0x75316420]
  %v1358 = vld.sshfl [vmem:[#allocation1 + $0x18] sm:$0xff pattern:$0x75316420]
  %v1359 = vld.sshfl [vmem:[#allocation1 + $0x20] sm:$0xff pattern:$0x75316420]
  %v1360 = vld.sshfl [vmem:[#allocation1 + $0x28] sm:$0xff pattern:$0x75316420]
  %v1361 = vld.sshfl [vmem:[#allocation1 + $0x30] sm:$0xff pattern:$0x75316420]
  %v1363 = vsel %vm486, %v1337, 0
  %v1365 = vsel %vm499, %v1355, 0
  %v1367 = vsel %vm499, %v1356, 0
  %v1369 = vsel %vm499, %v1357, 0
  %v1371 = vsel %vm499, %v1358, 0
  %v1373 = vsel %vm499, %v1359, 0
  %v1375 = vsel %vm499, %v1360, 0
  %v1377 = vsel %vm499, %v1361, 0
  %1379 = vmatpush.msra.mxu0 0.0
  %1380 = vmatpush.msra.mxu0 0.0
  %1381 = vmatpush.msra.mxu0 0.0
  %1382 = vmatpush.msra.mxu0 0.0
  %1383 = vmatpush.msra.mxu0 0.0
  %1384 = vmatpush.msra.mxu0 0.0
  %1385 = vmatpush.msra.mxu0 0.0
  %1386 = vmatpush.msra.mxu0 0.0
  %1387 = vmatpush.msra.mxu0 0.0
  %1388 = vmatpush.msra.mxu0 0.0
  %1389 = vmatpush.msra.mxu0 0.0
  %1390 = vmatpush.msra.mxu0 0.0
  %1391 = vmatpush.msra.mxu0 0.0
  %1392 = vmatpush.msra.mxu0 0.0
  %1393 = vmatpush.msra.mxu0 0.0
  %1394 = vmatpush.msra.mxu0 %v1365
  %1395 = vmatmul.f32.gmra.mxu0 %v1363
  %v1396 = vpop.f32.mrf.mxu0
  %v1397 = vadd.f32 0.0, %v1396
  %1398 = vdwg.mxu0
  %1399 = vmatpush.msra.mxu0 0.0
  %1400 = vmatpush.msra.mxu0 0.0
  %1401 = vmatpush.msra.mxu0 0.0
  %1402 = vmatpush.msra.mxu0 0.0
  %1403 = vmatpush.msra.mxu0 0.0
  %1404 = vmatpush.msra.mxu0 0.0
  %1405 = vmatpush.msra.mxu0 0.0
  %1406 = vmatpush.msra.mxu0 0.0
  %1407 = vmatpush.msra.mxu0 0.0
  %1408 = vmatpush.msra.mxu0 0.0
  %1409 = vmatpush.msra.mxu0 0.0
  %1410 = vmatpush.msra.mxu0 0.0
  %1411 = vmatpush.msra.mxu0 0.0
  %1412 = vmatpush.msra.mxu0 0.0
  %1413 = vmatpush.msra.mxu0 0.0
  %1414 = vmatpush.msra.mxu0 %v1367
  %1415 = vmatmul.f32.gmra.mxu0 %v1363
  %v1416 = vpop.f32.mrf.mxu0
  %v1417 = vadd.f32 0.0, %v1416
  %1418 = vdwg.mxu0
  %1419 = vmatpush.msra.mxu0 0.0
  %1420 = vmatpush.msra.mxu0 0.0
  %1421 = vmatpush.msra.mxu0 0.0
  %1422 = vmatpush.msra.mxu0 0.0
  %1423 = vmatpush.msra.mxu0 0.0
  %1424 = vmatpush.msra.mxu0 0.0
  %1425 = vmatpush.msra.mxu0 0.0
  %1426 = vmatpush.msra.mxu0 0.0
  %1427 = vmatpush.msra.mxu0 0.0
  %1428 = vmatpush.msra.mxu0 0.0
  %1429 = vmatpush.msra.mxu0 0.0
  %1430 = vmatpush.msra.mxu0 0.0
  %1431 = vmatpush.msra.mxu0 0.0
  %1432 = vmatpush.msra.mxu0 0.0
  %1433 = vmatpush.msra.mxu0 0.0
  %1434 = vmatpush.msra.mxu0 %v1369
  %1435 = vmatmul.f32.gmra.mxu0 %v1363
  %v1436 = vpop.f32.mrf.mxu0
  %v1437 = vadd.f32 0.0, %v1436
  %1438 = vdwg.mxu0
  %1439 = vmatpush.msra.mxu0 0.0
  %1440 = vmatpush.msra.mxu0 0.0
  %1441 = vmatpush.msra.mxu0 0.0
  %1442 = vmatpush.msra.mxu0 0.0
  %1443 = vmatpush.msra.mxu0 0.0
  %1444 = vmatpush.msra.mxu0 0.0
  %1445 = vmatpush.msra.mxu0 0.0
  %1446 = vmatpush.msra.mxu0 0.0
  %1447 = vmatpush.msra.mxu0 0.0
  %1448 = vmatpush.msra.mxu0 0.0
  %1449 = vmatpush.msra.mxu0 0.0
  %1450 = vmatpush.msra.mxu0 0.0
  %1451 = vmatpush.msra.mxu0 0.0
  %1452 = vmatpush.msra.mxu0 0.0
  %1453 = vmatpush.msra.mxu0 0.0
  %1454 = vmatpush.msra.mxu0 %v1371
  %1455 = vmatmul.f32.gmra.mxu0 %v1363
  %v1456 = vpop.f32.mrf.mxu0
  %v1457 = vadd.f32 0.0, %v1456
  %1458 = vdwg.mxu0
  %1459 = vmatpush.msra.mxu0 0.0
  %1460 = vmatpush.msra.mxu0 0.0
  %1461 = vmatpush.msra.mxu0 0.0
  %1462 = vmatpush.msra.mxu0 0.0
  %1463 = vmatpush.msra.mxu0 0.0
  %1464 = vmatpush.msra.mxu0 0.0
  %1465 = vmatpush.msra.mxu0 0.0
  %1466 = vmatpush.msra.mxu0 0.0
  %1467 = vmatpush.msra.mxu0 0.0
  %1468 = vmatpush.msra.mxu0 0.0
  %1469 = vmatpush.msra.mxu0 0.0
  %1470 = vmatpush.msra.mxu0 0.0
  %1471 = vmatpush.msra.mxu0 0.0
  %1472 = vmatpush.msra.mxu0 0.0
  %1473 = vmatpush.msra.mxu0 0.0
  %1474 = vmatpush.msra.mxu0 %v1373
  %1475 = vmatmul.f32.gmra.mxu0 %v1363
  %v1476 = vpop.f32.mrf.mxu0
  %v1477 = vadd.f32 0.0, %v1476
  %1478 = vdwg.mxu0
  %1479 = vmatpush.msra.mxu0 0.0
  %1480 = vmatpush.msra.mxu0 0.0
  %1481 = vmatpush.msra.mxu0 0.0
  %1482 = vmatpush.msra.mxu0 0.0
  %1483 = vmatpush.msra.mxu0 0.0
  %1484 = vmatpush.msra.mxu0 0.0
  %1485 = vmatpush.msra.mxu0 0.0
  %1486 = vmatpush.msra.mxu0 0.0
  %1487 = vmatpush.msra.mxu0 0.0
  %1488 = vmatpush.msra.mxu0 0.0
  %1489 = vmatpush.msra.mxu0 0.0
  %1490 = vmatpush.msra.mxu0 0.0
  %1491 = vmatpush.msra.mxu0 0.0
  %1492 = vmatpush.msra.mxu0 0.0
  %1493 = vmatpush.msra.mxu0 0.0
  %1494 = vmatpush.msra.mxu0 %v1375
  %1495 = vmatmul.f32.gmra.mxu0 %v1363
  %v1496 = vpop.f32.mrf.mxu0
  %v1497 = vadd.f32 0.0, %v1496
  %1498 = vdwg.mxu0
  %1499 = vmatpush.msra.mxu0 0.0
  %1500 = vmatpush.msra.mxu0 0.0
  %1501 = vmatpush.msra.mxu0 0.0
  %1502 = vmatpush.msra.mxu0 0.0
  %1503 = vmatpush.msra.mxu0 0.0
  %1504 = vmatpush.msra.mxu0 0.0
  %1505 = vmatpush.msra.mxu0 0.0
  %1506 = vmatpush.msra.mxu0 0.0
  %1507 = vmatpush.msra.mxu0 0.0
  %1508 = vmatpush.msra.mxu0 0.0
  %1509 = vmatpush.msra.mxu0 0.0
  %1510 = vmatpush.msra.mxu0 0.0
  %1511 = vmatpush.msra.mxu0 0.0
  %1512 = vmatpush.msra.mxu0 0.0
  %1513 = vmatpush.msra.mxu0 0.0
  %1514 = vmatpush.msra.mxu0 %v1377
  %1515 = vmatmul.f32.gmra.mxu0 %v1363
  %v1516 = vpop.f32.mrf.mxu0
  %v1517 = vadd.f32 0.0, %v1516
  %1518 = vdwg.mxu0
  %v1519 = vadd.f32 %v1307, %v1397
  %v1520 = vadd.f32 %v1308, %v1417
  %v1521 = vadd.f32 %v1309, %v1437
  %v1522 = vadd.f32 %v1310, %v1457
  %v1523 = vadd.f32 %v1311, %v1477
  %v1524 = vadd.f32 %v1312, %v1497
  %v1525 = vadd.f32 %v1313, %v1517
  %s1526 = sld [smem:[#allocation2]]
  %v1527 = vmax.f32 %v1519, 0.0
  %v1528 = vmax.f32 %v1520, 0.0
  %v1529 = vmax.f32 %v1521, 0.0
  %v1530 = vmax.f32 %v1522, 0.0
  %v1531 = vmax.f32 %v1523, 0.0
  %v1532 = vmax.f32 %v1524, 0.0
  %v1533 = vmax.f32 %v1525, 0.0
  %v1534 = vmin.f32 %v1519, 0.0
  %v1535 = vmin.f32 %v1520, 0.0
  %v1536 = vmin.f32 %v1521, 0.0
  %v1537 = vmin.f32 %v1522, 0.0
  %v1538 = vmin.f32 %v1523, 0.0
  %v1539 = vmin.f32 %v1524, 0.0
  %v1540 = vmin.f32 %v1525, 0.0
  %v1541 = vstv %s1526
  %v1542 = vmul.f32 %v1541, %v1534
  %v1543 = vmul.f32 %v1541, %v1535
  %v1544 = vmul.f32 %v1541, %v1536
  %v1545 = vmul.f32 %v1541, %v1537
  %v1546 = vmul.f32 %v1541, %v1538
  %v1547 = vmul.f32 %v1541, %v1539
  %v1548 = vmul.f32 %v1541, %v1540
  %v1549 = vadd.f32 %v1527, %v1542
  %v1550 = vadd.f32 %v1528, %v1543
  %v1551 = vadd.f32 %v1529, %v1544
  %v1552 = vadd.f32 %v1530, %v1545
  %v1553 = vadd.f32 %v1531, %v1546
  %v1554 = vadd.f32 %v1532, %v1547
  %v1555 = vadd.f32 %v1533, %v1548
  %v1556 = vld [vmem:[%s9] sm:$0xff]
  %v1557 = vld [vmem:[%s9 + $0x8] sm:$0xff]
  %v1558 = vld [vmem:[%s9 + $0x10] sm:$0xff]
  %v1559 = vld [vmem:[%s9 + $0x18] sm:$0xff]
  %v1560 = vld [vmem:[%s9 + $0x20] sm:$0xff]
  %v1561 = vld [vmem:[%s9 + $0x28] sm:$0xff]
  %v1562 = vld [vmem:[%s9 + $0x30] sm:$0xff]
  %v1563 = vld [vmem:[%s9 + $0x38] sm:$0xff]
  %v1564 = vld [vmem:[%s9 + $0x40] sm:$0xff]
  %v1565 = vld [vmem:[%s9 + $0x48] sm:$0xff]
  %v1566 = vld [vmem:[%s9 + $0x50] sm:$0xff]
  %v1567 = vld [vmem:[%s9 + $0x58] sm:$0xff]
  %v1568 = vld [vmem:[%s9 + $0x60] sm:$0xff]
  %v1569 = vld [vmem:[%s9 + $0x68] sm:$0xff]
  %v1570 = vld [vmem:[%s9 + $0x70] sm:$0xff]
  %v1571 = vld [vmem:[%s9 + $0x78] sm:$0xff]
  %v1572 = vld [vmem:[%s9 + $0x80] sm:$0xff]
  %v1573 = vld [vmem:[%s9 + $0x88] sm:$0xff]
  %v1574 = vld [vmem:[%s9 + $0x90] sm:$0xff]
  %v1575 = vld [vmem:[%s9 + $0x98] sm:$0xff]
  %v1576 = vld [vmem:[%s9 + $0xa0] sm:$0xff]
  %v1577 = vld [vmem:[%s9 + $0xa8] sm:$0xff]
  %v1578 = vld [vmem:[%s9 + $0xb0] sm:$0xff]
  %v1579 = vld [vmem:[%s9 + $0xb8] sm:$0xff]
  %v1580 = vld [vmem:[%s9 + $0xc0] sm:$0xff]
  %v1581 = vld [vmem:[%s9 + $0xc8] sm:$0xff]
  %v1582 = vld [vmem:[%s9 + $0xd0] sm:$0xff]
  %v1583 = vld [vmem:[%s9 + $0xd8] sm:$0xff]
  %v1584 = vld [vmem:[%s9 + $0xe0] sm:$0xff]
  %v1585 = vld [vmem:[%s9 + $0xe8] sm:$0xff]
  %v1586 = vld [vmem:[%s9 + $0xf0] sm:$0xff]
  %v1587 = vld [vmem:[%s9 + $0xf8] sm:$0xff]
  %v1588 = vld [vmem:[%s9 + $0x100] sm:$0xff]
  %v1589 = vld [vmem:[%s9 + $0x108] sm:$0xff]
  %v1590 = vld [vmem:[%s9 + $0x110] sm:$0xff]
  %v1591 = vld [vmem:[%s9 + $0x118] sm:$0xff]
  %v1592 = vld [vmem:[%s9 + $0x120] sm:$0xff]
  %v1593 = vld [vmem:[%s9 + $0x128] sm:$0xff]
  %v1594 = vld [vmem:[%s9 + $0x130] sm:$0xff]
  %v1595 = vld [vmem:[%s9 + $0x138] sm:$0xff]
  %v1596 = vld [vmem:[%s9 + $0x140] sm:$0xff]
  %v1597 = vld [vmem:[%s9 + $0x148] sm:$0xff]
  %v1598 = vld [vmem:[%s9 + $0x150] sm:$0xff]
  %v1599 = vld [vmem:[%s9 + $0x158] sm:$0xff]
  %v1600 = vld [vmem:[%s9 + $0x160] sm:$0xff]
  %v1601 = vld [vmem:[%s9 + $0x168] sm:$0xff]
  %v1602 = vld [vmem:[%s9 + $0x170] sm:$0xff]
  %v1603 = vld [vmem:[%s9 + $0x178] sm:$0xff]
  %v1604 = vld [vmem:[%s9 + $0x180] sm:$0xff]
  %v1605 = vld [vmem:[%s9 + $0x188] sm:$0xff]
  %v1606 = vld [vmem:[%s9 + $0x190] sm:$0xff]
  %v1607 = vld [vmem:[%s9 + $0x198] sm:$0xff]
  %v1608 = vld [vmem:[%s9 + $0x1a0] sm:$0xff]
  %v1609 = vld [vmem:[%s9 + $0x1a8] sm:$0xff]
  %v1610 = vld [vmem:[%s9 + $0x1b0] sm:$0xff]
  %v1611 = vld [vmem:[%s9 + $0x1b8] sm:$0xff]
  %v1612 = vld [vmem:[%s9 + $0x1c0] sm:$0xff]
  %v1613 = vld [vmem:[%s9 + $0x1c8] sm:$0xff]
  %v1614 = vld [vmem:[%s9 + $0x1d0] sm:$0xff]
  %v1615 = vld [vmem:[%s9 + $0x1d8] sm:$0xff]
  %v1616 = vld [vmem:[%s9 + $0x1e0] sm:$0xff]
  %v1617 = vld [vmem:[%s9 + $0x1e8] sm:$0xff]
  %v1618 = vld [vmem:[%s9 + $0x1f0] sm:$0xff]
  %v1619 = vld [vmem:[%s9 + $0x1f8] sm:$0xff]
  %v1620 = vld [vmem:[%s9 + $0x200] sm:$0xff]
  %v1621 = vld [vmem:[%s9 + $0x208] sm:$0xff]
  %v1622 = vld [vmem:[%s9 + $0x210] sm:$0xff]
  %v1623 = vld [vmem:[%s9 + $0x218] sm:$0xff]
  %v1624 = vld [vmem:[%s9 + $0x220] sm:$0xff]
  %v1625 = vld [vmem:[%s9 + $0x228] sm:$0xff]
  %v1626 = vld [vmem:[%s9 + $0x230] sm:$0xff]
  %v1627 = vld [vmem:[%s9 + $0x238] sm:$0xff]
  %v1628 = vld [vmem:[%s9 + $0x240] sm:$0xff]
  %v1629 = vld [vmem:[%s9 + $0x248] sm:$0xff]
  %v1630 = vld [vmem:[%s9 + $0x250] sm:$0xff]
  %v1631 = vld [vmem:[%s9 + $0x258] sm:$0xff]
  %v1632 = vld [vmem:[%s9 + $0x260] sm:$0xff]
  %v1633 = vld [vmem:[%s9 + $0x268] sm:$0xff]
  %v1634 = vld [vmem:[%s9 + $0x270] sm:$0xff]
  %v1635 = vld [vmem:[%s9 + $0x278] sm:$0xff]
  %v1636 = vld [vmem:[%s9 + $0x280] sm:$0xff]
  %v1637 = vld [vmem:[%s9 + $0x288] sm:$0xff]
  %v1638 = vld [vmem:[%s9 + $0x290] sm:$0xff]
  %v1639 = vld [vmem:[%s9 + $0x298] sm:$0xff]
  %v1640 = vld [vmem:[%s9 + $0x2a0] sm:$0xff]
  %v1641 = vld [vmem:[%s9 + $0x2a8] sm:$0xff]
  %v1642 = vld [vmem:[%s9 + $0x2b0] sm:$0xff]
  %v1643 = vld [vmem:[%s9 + $0x2b8] sm:$0xff]
  %v1644 = vld [vmem:[%s9 + $0x2c0] sm:$0xff]
  %v1645 = vld [vmem:[%s9 + $0x2c8] sm:$0xff]
  %v1646 = vld [vmem:[%s9 + $0x2d0] sm:$0xff]
  %v1647 = vld [vmem:[%s9 + $0x2d8] sm:$0xff]
  %v1648 = vld [vmem:[%s9 + $0x2e0] sm:$0xff]
  %v1649 = vld [vmem:[%s9 + $0x2e8] sm:$0xff]
  %v1650 = vld [vmem:[%s9 + $0x2f0] sm:$0xff]
  %v1651 = vld [vmem:[%s9 + $0x2f8] sm:$0xff]
  %v1652 = vld [vmem:[%s9 + $0x300] sm:$0xff]
  %v1653 = vld [vmem:[%s9 + $0x308] sm:$0xff]
  %v1654 = vld [vmem:[%s9 + $0x310] sm:$0xff]
  %v1655 = vld [vmem:[%s9 + $0x318] sm:$0xff]
  %vm1656 = vcmask 261120
  %v1658 = vsel %vm1656, %v1555, 0
  %1660 = vmatpush.msra.mxu0 %v1571
  %1661 = vmatpush.msra.mxu0 %v1570
  %1662 = vmatpush.msra.mxu0 %v1569
  %1663 = vmatpush.msra.mxu0 %v1568
  %1664 = vmatpush.msra.mxu0 %v1567
  %1665 = vmatpush.msra.mxu0 %v1566
  %1666 = vmatpush.msra.mxu0 %v1565
  %1667 = vmatpush.msra.mxu0 %v1564
  %1668 = vmatpush.msra.mxu0 %v1563
  %1669 = vmatpush.msra.mxu0 %v1562
  %1670 = vmatpush.msra.mxu0 %v1561
  %1671 = vmatpush.msra.mxu0 %v1560
  %1672 = vmatpush.msra.mxu0 %v1559
  %1673 = vmatpush.msra.mxu0 %v1558
  %1674 = vmatpush.msra.mxu0 %v1557
  %1675 = vmatpush.msra.mxu0 %v1556
  %1676 = vmatmul.f32.gmra.mxu0 %v1549
  %v1677 = vpop.f32.mrf.mxu0
  %v1678 = vadd.f32 0.0, %v1677
  %1679 = vdwg.mxu0
  %1680 = vmatpush.msra.mxu0 %v1587
  %1681 = vmatpush.msra.mxu0 %v1586
  %1682 = vmatpush.msra.mxu0 %v1585
  %1683 = vmatpush.msra.mxu0 %v1584
  %1684 = vmatpush.msra.mxu0 %v1583
  %1685 = vmatpush.msra.mxu0 %v1582
  %1686 = vmatpush.msra.mxu0 %v1581
  %1687 = vmatpush.msra.mxu0 %v1580
  %1688 = vmatpush.msra.mxu0 %v1579
  %1689 = vmatpush.msra.mxu0 %v1578
  %1690 = vmatpush.msra.mxu0 %v1577
  %1691 = vmatpush.msra.mxu0 %v1576
  %1692 = vmatpush.msra.mxu0 %v1575
  %1693 = vmatpush.msra.mxu0 %v1574
  %1694 = vmatpush.msra.mxu0 %v1573
  %1695 = vmatpush.msra.mxu0 %v1572
  %1696 = vmatmul.f32.gmra.mxu0 %v1550
  %v1697 = vpop.f32.mrf.mxu0
  %v1698 = vadd.f32 %v1678, %v1697
  %1699 = vdwg.mxu0
  %1700 = vmatpush.msra.mxu0 %v1603
  %1701 = vmatpush.msra.mxu0 %v1602
  %1702 = vmatpush.msra.mxu0 %v1601
  %1703 = vmatpush.msra.mxu0 %v1600
  %1704 = vmatpush.msra.mxu0 %v1599
  %1705 = vmatpush.msra.mxu0 %v1598
  %1706 = vmatpush.msra.mxu0 %v1597
  %1707 = vmatpush.msra.mxu0 %v1596
  %1708 = vmatpush.msra.mxu0 %v1595
  %1709 = vmatpush.msra.mxu0 %v1594
  %1710 = vmatpush.msra.mxu0 %v1593
  %1711 = vmatpush.msra.mxu0 %v1592
  %1712 = vmatpush.msra.mxu0 %v1591
  %1713 = vmatpush.msra.mxu0 %v1590
  %1714 = vmatpush.msra.mxu0 %v1589
  %1715 = vmatpush.msra.mxu0 %v1588
  %1716 = vmatmul.f32.gmra.mxu0 %v1551
  %v1717 = vpop.f32.mrf.mxu0
  %v1718 = vadd.f32 %v1698, %v1717
  %1719 = vdwg.mxu0
  %1720 = vmatpush.msra.mxu0 %v1619
  %1721 = vmatpush.msra.mxu0 %v1618
  %1722 = vmatpush.msra.mxu0 %v1617
  %1723 = vmatpush.msra.mxu0 %v1616
  %1724 = vmatpush.msra.mxu0 %v1615
  %1725 = vmatpush.msra.mxu0 %v1614
  %1726 = vmatpush.msra.mxu0 %v1613
  %1727 = vmatpush.msra.mxu0 %v1612
  %1728 = vmatpush.msra.mxu0 %v1611
  %1729 = vmatpush.msra.mxu0 %v1610
  %1730 = vmatpush.msra.mxu0 %v1609
  %1731 = vmatpush.msra.mxu0 %v1608
  %1732 = vmatpush.msra.mxu0 %v1607
  %1733 = vmatpush.msra.mxu0 %v1606
  %1734 = vmatpush.msra.mxu0 %v1605
  %1735 = vmatpush.msra.mxu0 %v1604
  %1736 = vmatmul.f32.gmra.mxu0 %v1552
  %v1737 = vpop.f32.mrf.mxu0
  %v1738 = vadd.f32 %v1718, %v1737
  %1739 = vdwg.mxu0
  %1740 = vmatpush.msra.mxu0 %v1635
  %1741 = vmatpush.msra.mxu0 %v1634
  %1742 = vmatpush.msra.mxu0 %v1633
  %1743 = vmatpush.msra.mxu0 %v1632
  %1744 = vmatpush.msra.mxu0 %v1631
  %1745 = vmatpush.msra.mxu0 %v1630
  %1746 = vmatpush.msra.mxu0 %v1629
  %1747 = vmatpush.msra.mxu0 %v1628
  %1748 = vmatpush.msra.mxu0 %v1627
  %1749 = vmatpush.msra.mxu0 %v1626
  %1750 = vmatpush.msra.mxu0 %v1625
  %1751 = vmatpush.msra.mxu0 %v1624
  %1752 = vmatpush.msra.mxu0 %v1623
  %1753 = vmatpush.msra.mxu0 %v1622
  %1754 = vmatpush.msra.mxu0 %v1621
  %1755 = vmatpush.msra.mxu0 %v1620
  %1756 = vmatmul.f32.gmra.mxu0 %v1553
  %v1757 = vpop.f32.mrf.mxu0
  %v1758 = vadd.f32 %v1738, %v1757
  %1759 = vdwg.mxu0
  %1760 = vmatpush.msra.mxu0 %v1651
  %1761 = vmatpush.msra.mxu0 %v1650
  %1762 = vmatpush.msra.mxu0 %v1649
  %1763 = vmatpush.msra.mxu0 %v1648
  %1764 = vmatpush.msra.mxu0 %v1647
  %1765 = vmatpush.msra.mxu0 %v1646
  %1766 = vmatpush.msra.mxu0 %v1645
  %1767 = vmatpush.msra.mxu0 %v1644
  %1768 = vmatpush.msra.mxu0 %v1643
  %1769 = vmatpush.msra.mxu0 %v1642
  %1770 = vmatpush.msra.mxu0 %v1641
  %1771 = vmatpush.msra.mxu0 %v1640
  %1772 = vmatpush.msra.mxu0 %v1639
  %1773 = vmatpush.msra.mxu0 %v1638
  %1774 = vmatpush.msra.mxu0 %v1637
  %1775 = vmatpush.msra.mxu0 %v1636
  %1776 = vmatmul.f32.gmra.mxu0 %v1554
  %v1777 = vpop.f32.mrf.mxu0
  %v1778 = vadd.f32 %v1758, %v1777
  %1779 = vdwg.mxu0
  %1780 = vmatpush.msra.mxu0 0.0
  %1781 = vmatpush.msra.mxu0 0.0
  %1782 = vmatpush.msra.mxu0 0.0
  %1783 = vmatpush.msra.mxu0 0.0
  %1784 = vmatpush.msra.mxu0 0.0
  %1785 = vmatpush.msra.mxu0 0.0
  %1786 = vmatpush.msra.mxu0 0.0
  %1787 = vmatpush.msra.mxu0 0.0
  %1788 = vmatpush.msra.mxu0 0.0
  %1789 = vmatpush.msra.mxu0 0.0
  %1790 = vmatpush.msra.mxu0 0.0
  %1791 = vmatpush.msra.mxu0 0.0
  %1792 = vmatpush.msra.mxu0 %v1655
  %1793 = vmatpush.msra.mxu0 %v1654
  %1794 = vmatpush.msra.mxu0 %v1653
  %1795 = vmatpush.msra.mxu0 %v1652
  %1796 = vmatmul.f32.gmra.mxu0 %v1658
  %v1797 = vpop.f32.mrf.mxu0
  %v1798 = vadd.f32 %v1778, %v1797
  %1799 = vdwg.mxu0
  %vm1800 = vcmask 254976
  %1801 = vst.msk [vmem:[%s10] sm:$0x3] %vm1800, %v1798
  // Predicated region
  $region42: #{multivariate_decoder_forward.1} parent=0 // pred_check
    _
  $region43: #{multivariate_decoder_forward.1} parent=0 // pred_check_branch
    %1803 = sbr.rel (0) target = $region45
  $region44: #{multivariate_decoder_forward.1} parent=0 // pred_region
    _
  $region45: #{multivariate_decoder_forward.1} parent=0 // pred_fallthru
    _
  // Predicated region
  $region46: #{multivariate_decoder_forward.1} parent=0 // pred_check
    _
  $region47: #{multivariate_decoder_forward.1} parent=0 // pred_check_branch
    %1805 = sbr.rel (0) target = $region49
  $region48: #{multivariate_decoder_forward.1} parent=0 // pred_region
    _
  $region49: #{multivariate_decoder_forward.1} parent=0 // pred_fallthru
    _

</llo_original>
